<compile_context>
chip_gen: v7x
topology: tpu7x:2x2x1
jax: 0.10.0
libtpu: 0.0.40
codegen_flags: <defaults>
</compile_context>

<pallas_src>
import functools
import math

import numpy as np
import jax
import jax.numpy as jnp
from jax import lax
from jax.experimental import pallas as pl
from jax.experimental.pallas import tpu as pltpu

LN_EPS = 1e-5      # torch.nn.LayerNorm default eps
NEG_BIG = -1e30    # additive mask value for cross-batch attention entries


def _decoder_kernel(xt_ref, w_ref, aux_ref, bias_ref, o_ref, *, B, C, N, L):
    BN = B * N
    inv_sqrt_c = 1.0 / math.sqrt(C)
    inv_cnt = 1.0 / (C * N)

    xt = xt_ref[...]                       # (C, B*(N+L))  [x | t], batch in lanes
    w_qkv = w_ref[: 3 * C, :]              # (3C, C)  [Wq; Wk; Wv]
    wf1 = w_ref[3 * C: 4 * C, :]           # (C, C)
    wf2 = w_ref[4 * C:, :]                 # (C, C)
    gamma = aux_ref[:C, :]                 # (C, B*N)  LN weight, tiled over batch
    beta = aux_ref[C: 2 * C, :]            # (C, B*N)
    lnm = aux_ref[2 * C: 2 * C + B, :]     # (B, B*N)  exact 0/1 per-batch col masks
    bias = bias_ref[...]                   # (B*N, B*L)  0 / -1e30 block-diag bias

    # --- fused Q/K/V projections: one MXU matmul over the [x | t] slab --------
    qkv = jnp.dot(w_qkv, xt, preferred_element_type=jnp.float32)   # (3C, B*(N+L))
    q = qkv[:C, :BN]                       # (C, B*N)   Wq @ x
    k = qkv[C: 2 * C, BN:]                 # (C, B*L)   Wk @ t
    v = qkv[2 * C:, BN:]                   # (C, B*L)   Wv @ t

    # --- batched attention (block-diagonal additive bias, no transposes) ------
    # s[j, m] = <q[:, j], k[:, m]>  (contract dim 0 of both operands)
    s = lax.dot_general(q, k, (((0,), (0,)), ((), ())),
                        preferred_element_type=jnp.float32)        # (B*N, B*L)
    s = s * inv_sqrt_c + bias
    s = s - jnp.max(s, axis=-1, keepdims=True)
    p = jnp.exp(s)                                    # cross-batch entries -> 0
    attn = p * pl.reciprocal(jnp.sum(p, axis=-1, keepdims=True), approx=False)

    # ctx[c, j] = sum_m v[c, m] * attn[j, m]  (contract dim 1 of both operands)
    ctx = lax.dot_general(v, attn, (((1,), (1,)), ((), ())),
                          preferred_element_type=jnp.float32)      # (C, B*N)

    # --- one-pass LayerNorm([C, N]) per batch on the fused (C, B*N) slab ------
    def slab_layernorm(y):
        y2 = y * y
        mu_row = jnp.zeros((1, BN), jnp.float32)
        istd_row = jnp.zeros((1, BN), jnp.float32)
        for b in range(B):                 # static unroll, B is tiny
            m = lnm[b: b + 1, :]           # (1, B*N), exact 0/1
            s1 = jnp.sum(y * m)            # independent reductions: pipeline
            s2 = jnp.sum(y2 * m)
            mu_b = s1 * inv_cnt
            var_b = s2 * inv_cnt - mu_b * mu_b
            istd_b = lax.rsqrt(var_b + LN_EPS)
            mu_row = mu_row + mu_b * m
            istd_row = istd_row + istd_b * m
        return (y - mu_row) * istd_row * gamma + beta

    x_in = xt[:, :BN]                                      # original X columns
    x_out = slab_layernorm(x_in + ctx)                     # (C, B*N)

    # --- feed-forward (batched 1x1 convs) + second LayerNorm -------------------
    h1 = jnp.maximum(jnp.dot(wf1, x_out, preferred_element_type=jnp.float32), 0.0)
    h2 = jnp.dot(wf2, h1, preferred_element_type=jnp.float32)
    o_ref[...] = slab_layernorm(x_out + h2)                # (C, B*N)


@jax.jit
def transformer_decoder(x, t, params):
    """x: (B, C, N) float32, t: (B, C, L) float32."""
    B, C, N = x.shape
    L = t.shape[2]
    wq, wk, wv, wf1, wf2, gamma, beta = params

    # ---- trace-time constants (NumPy; B, N, L are static) --------------------
    row_b = np.arange(B * N, dtype=np.int32)[:, None] // N
    col_b = np.arange(B * L, dtype=np.int32)[None, :] // L
    bias = jnp.asarray(np.where(row_b == col_b, 0.0, NEG_BIG).astype(np.float32))
    lnmask = jnp.asarray(
        (np.arange(B, dtype=np.int32)[:, None]
         == (np.arange(B * N, dtype=np.int32)[None, :] // N)).astype(np.float32))

    # ---- fold batch into the lane axis; pack operands into 4 slabs -----------
    x_f = jnp.transpose(x, (1, 0, 2)).reshape(C, B * N)          # (C, B*N)
    t_f = jnp.transpose(t, (1, 0, 2)).reshape(C, B * L)          # (C, B*L)
    xt = jnp.concatenate([x_f, t_f], axis=1)                     # (C, B*(N+L))
    w_all = jnp.concatenate([wq, wk, wv, wf1, wf2], axis=0)      # (5C, C)
    aux = jnp.concatenate([jnp.tile(gamma, (1, B)),
                           jnp.tile(beta, (1, B)),
                           lnmask], axis=0)                      # (2C+B, B*N)

    flops = (2 * 3 * C * C * B * (N + L)            # fused qkv projection
             + 2 * 2 * C * (B * N) * (B * L)        # logits + context
             + 2 * 2 * C * C * B * N)               # feed-forward
    bytes_accessed = 4 * (xt.size + w_all.size + aux.size + bias.size + C * B * N)
    transcendentals = (B * N) * (B * L) + 2 * B

    kernel = functools.partial(_decoder_kernel, B=B, C=C, N=N, L=L)
    out_f = pl.pallas_call(
        kernel,
        out_shape=jax.ShapeDtypeStruct((C, B * N), jnp.float32),
        compiler_params=pltpu.CompilerParams(
            allow_input_fusion=[True, True, True, True]),
        cost_estimate=pl.CostEstimate(flops=flops,
                                      transcendentals=transcendentals,
                                      bytes_accessed=bytes_accessed),
    )(xt, w_all, aux, bias)

    # (C, B*N) -> (B, C, N)
    return jnp.transpose(out_f.reshape(C, B, N), (1, 0, 2))


def reference(x, t, params):
    """Pure-JAX reference mirroring the PyTorch forward pass exactly."""
    wq, wk, wv, wf1, wf2, gamma, beta = params
    C = x.shape[1]
    q = jnp.einsum('oc,bcn->bon', wq, x)
    k = jnp.einsum('oc,bcl->bol', wk, t)
    v = jnp.einsum('oc,bcl->bol', wv, t)
    s = jnp.einsum('bcn,bcl->bnl', q, k) / math.sqrt(C)
    a = jax.nn.softmax(s, axis=-1)                          # (B, N, L)
    ctx = jnp.einsum('bcl,bnl->bcn', v, a)

    def ln(y):
        mu = jnp.mean(y, axis=(1, 2), keepdims=True)
        var = jnp.mean((y - mu) ** 2, axis=(1, 2), keepdims=True)
        return (y - mu) / jnp.sqrt(var + LN_EPS) * gamma + beta

    x_out = ln(x + ctx)
    h = jnp.einsum('oc,bcn->bon', wf2,
                   jnp.maximum(jnp.einsum('oc,bcn->bon', wf1, x_out), 0.0))
    return ln(x_out + h)


if __name__ == "__main__":
    # feature_map_cs == visual_tokens_cs == C is required by the module's own
    # LayerNorm / f1 usage; N == 24 is required by LayerNorm([visual_tokens_cs, 24]).
    B, C, N, L = 2, 32, 24, 8

    key = jax.random.PRNGKey(0)
    ks = jax.random.split(key, 10)
    x = jax.random.normal(ks[0], (B, C, N), jnp.float32)
    t = jax.random.normal(ks[1], (B, C, L), jnp.float32)

    scale = 1.0 / math.sqrt(C)
    wq = jax.random.normal(ks[2], (C, C), jnp.float32) * scale
    wk = jax.random.normal(ks[3], (C, C), jnp.float32) * scale
    wv = jax.random.normal(ks[4], (C, C), jnp.float32) * scale
    wf1 = jax.random.normal(ks[5], (C, C), jnp.float32) * scale
    wf2 = jax.random.normal(ks[6], (C, C), jnp.float32) * scale
    # Non-trivial affine params to exercise the per-element LayerNorm affine.
    gamma = 1.0 + 0.1 * jax.random.normal(ks[7], (C, N), jnp.float32)
    beta = 0.1 * jax.random.normal(ks[8], (C, N), jnp.float32)
    params = (wq, wk, wv, wf1, wf2, gamma, beta)

    out = transformer_decoder(x, t, params)
    jax.block_until_ready(out)

    ref = reference(x, t, params)
    assert out.shape == (B, C, N)
    assert jnp.allclose(out, ref, atol=1e-4, rtol=1e-4), "Pallas output mismatch vs reference"
    print("KERNEL_OK")
</pallas_src>

<mosaic_0001>
module attributes {stable_mosaic.version = 11 : i64} {
  func.func @_decoder_kernel(%arg0: memref<32x64xf32, #tpu.memory_space<vmem>>, %arg1: memref<160x32xf32, #tpu.memory_space<vmem>>, %arg2: memref<66x48xf32, #tpu.memory_space<vmem>>, %arg3: memref<48x16xf32, #tpu.memory_space<vmem>>, %arg4: memref<32x48xf32, #tpu.memory_space<vmem>>) attributes {dimension_semantics = [], scalar_prefetch = 0 : i64, scratch_operands = 0 : i64, tpu.core_type = #tpu.core_type<tc>} {
    %c0 = arith.constant 0 : index
    %c0_0 = arith.constant 0 : index
    %0 = vector.load %arg0[%c0, %c0_0] : memref<32x64xf32, #tpu.memory_space<vmem>>, vector<32x64xf32>
    %c0_1 = arith.constant 0 : index
    %c0_2 = arith.constant 0 : index
    %1 = vector.load %arg1[%c0_1, %c0_2] : memref<160x32xf32, #tpu.memory_space<vmem>>, vector<96x32xf32>
    %c96 = arith.constant 96 : index
    %c0_3 = arith.constant 0 : index
    %2 = vector.load %arg1[%c96, %c0_3] : memref<160x32xf32, #tpu.memory_space<vmem>>, vector<32x32xf32>
    %c128 = arith.constant 128 : index
    %c0_4 = arith.constant 0 : index
    %3 = vector.load %arg1[%c128, %c0_4] : memref<160x32xf32, #tpu.memory_space<vmem>>, vector<32x32xf32>
    %c0_5 = arith.constant 0 : index
    %c0_6 = arith.constant 0 : index
    %4 = vector.load %arg2[%c0_5, %c0_6] : memref<66x48xf32, #tpu.memory_space<vmem>>, vector<32x48xf32>
    %c32 = arith.constant 32 : index
    %c0_7 = arith.constant 0 : index
    %5 = vector.load %arg2[%c32, %c0_7] : memref<66x48xf32, #tpu.memory_space<vmem>>, vector<32x48xf32>
    %c64 = arith.constant 64 : index
    %c0_8 = arith.constant 0 : index
    %6 = vector.load %arg2[%c64, %c0_8] : memref<66x48xf32, #tpu.memory_space<vmem>>, vector<2x48xf32>
    %c0_9 = arith.constant 0 : index
    %c0_10 = arith.constant 0 : index
    %7 = vector.load %arg3[%c0_9, %c0_10] : memref<48x16xf32, #tpu.memory_space<vmem>>, vector<48x16xf32>
    %cst = arith.constant dense<0.000000e+00> : vector<96x64xf32>
    %8 = tpu.matmul %1, %0, %cst {dimension_numbers = #tpu.dot_dimension_numbers<[1], [0], [0], [1], [0, 0, 1, 1], [], []>} : vector<96x32xf32>, vector<32x64xf32>, vector<96x64xf32> -> vector<96x64xf32>
    %9 = vector.extract_strided_slice %8 {offsets = [0, 0], sizes = [32, 48], strides = [1, 1]} : vector<96x64xf32> to vector<32x48xf32>
    %10 = vector.extract_strided_slice %8 {offsets = [32, 48], sizes = [32, 16], strides = [1, 1]} : vector<96x64xf32> to vector<32x16xf32>
    %11 = vector.extract_strided_slice %8 {offsets = [64, 48], sizes = [32, 16], strides = [1, 1]} : vector<96x64xf32> to vector<32x16xf32>
    %cst_11 = arith.constant dense<0.000000e+00> : vector<48x16xf32>
    %12 = tpu.matmul %9, %10, %cst_11 {dimension_numbers = #tpu.dot_dimension_numbers<[0], [0], [1], [1], [0, 1, 1, 1], [], []>} : vector<32x48xf32>, vector<32x16xf32>, vector<48x16xf32> -> vector<48x16xf32>
    %cst_12 = arith.constant 0.176776692 : f32
    %13 = vector.broadcast %cst_12 : f32 to vector<48x16xf32>
    %14 = arith.mulf %12, %13 : vector<48x16xf32>
    %15 = arith.addf %14, %7 : vector<48x16xf32>
    %cst_13 = arith.constant dense<0xFF800000> : vector<48xf32>
    %16 = vector.multi_reduction <maximumf>, %15, %cst_13 [1] : vector<48x16xf32> to vector<48xf32>
    %17 = vector.shape_cast %16 : vector<48xf32> to vector<48x1xf32>
    %18 = vector.broadcast %17 : vector<48x1xf32> to vector<48x16xf32>
    %19 = arith.subf %15, %18 : vector<48x16xf32>
    %20 = math.exp %19 : vector<48x16xf32>
    %cst_14 = arith.constant dense<0.000000e+00> : vector<48xf32>
    %21 = vector.multi_reduction <add>, %20, %cst_14 [1] : vector<48x16xf32> to vector<48xf32>
    %22 = vector.shape_cast %21 : vector<48xf32> to vector<48x1xf32>
    %23 = tpu.reciprocal %22 : vector<48x1xf32> -> vector<48x1xf32>
    %24 = vector.broadcast %23 : vector<48x1xf32> to vector<48x16xf32>
    %25 = arith.mulf %20, %24 : vector<48x16xf32>
    %cst_15 = arith.constant dense<0.000000e+00> : vector<32x48xf32>
    %26 = tpu.matmul %11, %25, %cst_15 {dimension_numbers = #tpu.dot_dimension_numbers<[1], [1], [0], [0], [0, 0, 1, 0], [], []>} : vector<32x16xf32>, vector<48x16xf32>, vector<32x48xf32> -> vector<32x48xf32>
    %27 = vector.extract_strided_slice %0 {offsets = [0, 0], sizes = [32, 48], strides = [1, 1]} : vector<32x64xf32> to vector<32x48xf32>
    %28 = arith.addf %27, %26 : vector<32x48xf32>
    %29 = arith.mulf %28, %28 : vector<32x48xf32>
    %cst_16 = arith.constant 0.000000e+00 : f32
    %30 = vector.broadcast %cst_16 : f32 to vector<1x48xf32>
    %cst_17 = arith.constant 0.000000e+00 : f32
    %31 = vector.broadcast %cst_17 : f32 to vector<1x48xf32>
    %32 = vector.extract_strided_slice %6 {offsets = [0, 0], sizes = [1, 48], strides = [1, 1]} : vector<2x48xf32> to vector<1x48xf32>
    %33 = vector.broadcast %32 : vector<1x48xf32> to vector<32x48xf32>
    %34 = arith.mulf %28, %33 : vector<32x48xf32>
    %35 = vector.shape_cast %34 : vector<32x48xf32> to vector<1x32x48xf32>
    %cst_18 = arith.constant dense<0.000000e+00> : vector<1xf32>
    %36 = vector.multi_reduction <add>, %35, %cst_18 [1, 2] : vector<1x32x48xf32> to vector<1xf32>
    %37 = vector.shape_cast %36 : vector<1xf32> to vector<1x1x1xf32>
    %38 = vector.extract %37[0, 0, 0] : f32 from vector<1x1x1xf32>
    %39 = vector.broadcast %32 : vector<1x48xf32> to vector<32x48xf32>
    %40 = arith.mulf %29, %39 : vector<32x48xf32>
    %41 = vector.shape_cast %40 : vector<32x48xf32> to vector<1x32x48xf32>
    %cst_19 = arith.constant dense<0.000000e+00> : vector<1xf32>
    %42 = vector.multi_reduction <add>, %41, %cst_19 [1, 2] : vector<1x32x48xf32> to vector<1xf32>
    %43 = vector.shape_cast %42 : vector<1xf32> to vector<1x1x1xf32>
    %44 = vector.extract %43[0, 0, 0] : f32 from vector<1x1x1xf32>
    %cst_20 = arith.constant 0.00130208337 : f32
    %45 = arith.mulf %38, %cst_20 : f32
    %cst_21 = arith.constant 0.00130208337 : f32
    %46 = arith.mulf %44, %cst_21 : f32
    %47 = arith.mulf %45, %45 : f32
    %48 = arith.subf %46, %47 : f32
    %cst_22 = arith.constant 9.99999974E-6 : f32
    %49 = arith.addf %48, %cst_22 : f32
    %50 = math.rsqrt %49 : f32
    %51 = vector.broadcast %45 : f32 to vector<1x48xf32>
    %52 = arith.mulf %51, %32 : vector<1x48xf32>
    %53 = arith.addf %30, %52 : vector<1x48xf32>
    %54 = vector.broadcast %50 : f32 to vector<1x48xf32>
    %55 = arith.mulf %54, %32 : vector<1x48xf32>
    %56 = arith.addf %31, %55 : vector<1x48xf32>
    %57 = vector.extract_strided_slice %6 {offsets = [1, 0], sizes = [1, 48], strides = [1, 1]} : vector<2x48xf32> to vector<1x48xf32>
    %58 = vector.broadcast %57 : vector<1x48xf32> to vector<32x48xf32>
    %59 = arith.mulf %28, %58 : vector<32x48xf32>
    %60 = vector.shape_cast %59 : vector<32x48xf32> to vector<1x32x48xf32>
    %cst_23 = arith.constant dense<0.000000e+00> : vector<1xf32>
    %61 = vector.multi_reduction <add>, %60, %cst_23 [1, 2] : vector<1x32x48xf32> to vector<1xf32>
    %62 = vector.shape_cast %61 : vector<1xf32> to vector<1x1x1xf32>
    %63 = vector.extract %62[0, 0, 0] : f32 from vector<1x1x1xf32>
    %64 = vector.broadcast %57 : vector<1x48xf32> to vector<32x48xf32>
    %65 = arith.mulf %29, %64 : vector<32x48xf32>
    %66 = vector.shape_cast %65 : vector<32x48xf32> to vector<1x32x48xf32>
    %cst_24 = arith.constant dense<0.000000e+00> : vector<1xf32>
    %67 = vector.multi_reduction <add>, %66, %cst_24 [1, 2] : vector<1x32x48xf32> to vector<1xf32>
    %68 = vector.shape_cast %67 : vector<1xf32> to vector<1x1x1xf32>
    %69 = vector.extract %68[0, 0, 0] : f32 from vector<1x1x1xf32>
    %cst_25 = arith.constant 0.00130208337 : f32
    %70 = arith.mulf %63, %cst_25 : f32
    %cst_26 = arith.constant 0.00130208337 : f32
    %71 = arith.mulf %69, %cst_26 : f32
    %72 = arith.mulf %70, %70 : f32
    %73 = arith.subf %71, %72 : f32
    %cst_27 = arith.constant 9.99999974E-6 : f32
    %74 = arith.addf %73, %cst_27 : f32
    %75 = math.rsqrt %74 : f32
    %76 = vector.broadcast %70 : f32 to vector<1x48xf32>
    %77 = arith.mulf %76, %57 : vector<1x48xf32>
    %78 = arith.addf %53, %77 : vector<1x48xf32>
    %79 = vector.broadcast %75 : f32 to vector<1x48xf32>
    %80 = arith.mulf %79, %57 : vector<1x48xf32>
    %81 = arith.addf %56, %80 : vector<1x48xf32>
    %82 = vector.broadcast %78 : vector<1x48xf32> to vector<32x48xf32>
    %83 = arith.subf %28, %82 : vector<32x48xf32>
    %84 = vector.broadcast %81 : vector<1x48xf32> to vector<32x48xf32>
    %85 = arith.mulf %83, %84 : vector<32x48xf32>
    %86 = arith.mulf %85, %4 : vector<32x48xf32>
    %87 = arith.addf %86, %5 : vector<32x48xf32>
    %cst_28 = arith.constant dense<0.000000e+00> : vector<32x48xf32>
    %88 = tpu.matmul %2, %87, %cst_28 {dimension_numbers = #tpu.dot_dimension_numbers<[1], [0], [0], [1], [0, 0, 1, 1], [], []>} : vector<32x32xf32>, vector<32x48xf32>, vector<32x48xf32> -> vector<32x48xf32>
    %cst_29 = arith.constant 0.000000e+00 : f32
    %89 = vector.broadcast %cst_29 : f32 to vector<32x48xf32>
    %90 = arith.maximumf %88, %89 : vector<32x48xf32>
    %cst_30 = arith.constant dense<0.000000e+00> : vector<32x48xf32>
    %91 = tpu.matmul %3, %90, %cst_30 {dimension_numbers = #tpu.dot_dimension_numbers<[1], [0], [0], [1], [0, 0, 1, 1], [], []>} : vector<32x32xf32>, vector<32x48xf32>, vector<32x48xf32> -> vector<32x48xf32>
    %92 = arith.addf %87, %91 : vector<32x48xf32>
    %93 = arith.mulf %92, %92 : vector<32x48xf32>
    %cst_31 = arith.constant 0.000000e+00 : f32
    %94 = vector.broadcast %cst_31 : f32 to vector<1x48xf32>
    %cst_32 = arith.constant 0.000000e+00 : f32
    %95 = vector.broadcast %cst_32 : f32 to vector<1x48xf32>
    %96 = vector.extract_strided_slice %6 {offsets = [0, 0], sizes = [1, 48], strides = [1, 1]} : vector<2x48xf32> to vector<1x48xf32>
    %97 = vector.broadcast %96 : vector<1x48xf32> to vector<32x48xf32>
    %98 = arith.mulf %92, %97 : vector<32x48xf32>
    %99 = vector.shape_cast %98 : vector<32x48xf32> to vector<1x32x48xf32>
    %cst_33 = arith.constant dense<0.000000e+00> : vector<1xf32>
    %100 = vector.multi_reduction <add>, %99, %cst_33 [1, 2] : vector<1x32x48xf32> to vector<1xf32>
    %101 = vector.shape_cast %100 : vector<1xf32> to vector<1x1x1xf32>
    %102 = vector.extract %101[0, 0, 0] : f32 from vector<1x1x1xf32>
    %103 = vector.broadcast %96 : vector<1x48xf32> to vector<32x48xf32>
    %104 = arith.mulf %93, %103 : vector<32x48xf32>
    %105 = vector.shape_cast %104 : vector<32x48xf32> to vector<1x32x48xf32>
    %cst_34 = arith.constant dense<0.000000e+00> : vector<1xf32>
    %106 = vector.multi_reduction <add>, %105, %cst_34 [1, 2] : vector<1x32x48xf32> to vector<1xf32>
    %107 = vector.shape_cast %106 : vector<1xf32> to vector<1x1x1xf32>
    %108 = vector.extract %107[0, 0, 0] : f32 from vector<1x1x1xf32>
    %cst_35 = arith.constant 0.00130208337 : f32
    %109 = arith.mulf %102, %cst_35 : f32
    %cst_36 = arith.constant 0.00130208337 : f32
    %110 = arith.mulf %108, %cst_36 : f32
    %111 = arith.mulf %109, %109 : f32
    %112 = arith.subf %110, %111 : f32
    %cst_37 = arith.constant 9.99999974E-6 : f32
    %113 = arith.addf %112, %cst_37 : f32
    %114 = math.rsqrt %113 : f32
    %115 = vector.broadcast %109 : f32 to vector<1x48xf32>
    %116 = arith.mulf %115, %96 : vector<1x48xf32>
    %117 = arith.addf %94, %116 : vector<1x48xf32>
    %118 = vector.broadcast %114 : f32 to vector<1x48xf32>
    %119 = arith.mulf %118, %96 : vector<1x48xf32>
    %120 = arith.addf %95, %119 : vector<1x48xf32>
    %121 = vector.extract_strided_slice %6 {offsets = [1, 0], sizes = [1, 48], strides = [1, 1]} : vector<2x48xf32> to vector<1x48xf32>
    %122 = vector.broadcast %121 : vector<1x48xf32> to vector<32x48xf32>
    %123 = arith.mulf %92, %122 : vector<32x48xf32>
    %124 = vector.shape_cast %123 : vector<32x48xf32> to vector<1x32x48xf32>
    %cst_38 = arith.constant dense<0.000000e+00> : vector<1xf32>
    %125 = vector.multi_reduction <add>, %124, %cst_38 [1, 2] : vector<1x32x48xf32> to vector<1xf32>
    %126 = vector.shape_cast %125 : vector<1xf32> to vector<1x1x1xf32>
    %127 = vector.extract %126[0, 0, 0] : f32 from vector<1x1x1xf32>
    %128 = vector.broadcast %121 : vector<1x48xf32> to vector<32x48xf32>
    %129 = arith.mulf %93, %128 : vector<32x48xf32>
    %130 = vector.shape_cast %129 : vector<32x48xf32> to vector<1x32x48xf32>
    %cst_39 = arith.constant dense<0.000000e+00> : vector<1xf32>
    %131 = vector.multi_reduction <add>, %130, %cst_39 [1, 2] : vector<1x32x48xf32> to vector<1xf32>
    %132 = vector.shape_cast %131 : vector<1xf32> to vector<1x1x1xf32>
    %133 = vector.extract %132[0, 0, 0] : f32 from vector<1x1x1xf32>
    %cst_40 = arith.constant 0.00130208337 : f32
    %134 = arith.mulf %127, %cst_40 : f32
    %cst_41 = arith.constant 0.00130208337 : f32
    %135 = arith.mulf %133, %cst_41 : f32
    %136 = arith.mulf %134, %134 : f32
    %137 = arith.subf %135, %136 : f32
    %cst_42 = arith.constant 9.99999974E-6 : f32
    %138 = arith.addf %137, %cst_42 : f32
    %139 = math.rsqrt %138 : f32
    %140 = vector.broadcast %134 : f32 to vector<1x48xf32>
    %141 = arith.mulf %140, %121 : vector<1x48xf32>
    %142 = arith.addf %117, %141 : vector<1x48xf32>
    %143 = vector.broadcast %139 : f32 to vector<1x48xf32>
    %144 = arith.mulf %143, %121 : vector<1x48xf32>
    %145 = arith.addf %120, %144 : vector<1x48xf32>
    %146 = vector.broadcast %142 : vector<1x48xf32> to vector<32x48xf32>
    %147 = arith.subf %92, %146 : vector<32x48xf32>
    %148 = vector.broadcast %145 : vector<1x48xf32> to vector<32x48xf32>
    %149 = arith.mulf %147, %148 : vector<32x48xf32>
    %150 = arith.mulf %149, %4 : vector<32x48xf32>
    %151 = arith.addf %150, %5 : vector<32x48xf32>
    %c0_43 = arith.constant 0 : index
    %c0_44 = arith.constant 0 : index
    %152 = vector.load %arg4[%c0_43, %c0_44] : memref<32x48xf32, #tpu.memory_space<vmem>>, vector<32x48xf32>
    tpu.vector_store %arg4[%c0_43, %c0_44], %151 {strides = array<i32>} : memref<32x48xf32, #tpu.memory_space<vmem>>, vector<32x48xf32>,
    return
  }
}

</mosaic_0001>

<llo_original>
// kernel: transformer_decoder.2
$region0: #{transformer_decoder.2}
  #allocation0 [shape = 'u32[]', space=smem, size = 0x4, offset = 0x4, fixed_abs, tag = 'smem constant byte address 0x4 - core index']
  #allocation1 [shape = 'u32[144,128]{1,0:T(1,128)}', space=vmem, size = 0x12000, scoped, tag = 'internal scratch']
  #allocation2 [shape = 'u32[2048]{0}', space=vmem, size = 0x2000, scoped, tag = 'scoped memory for transformer_decoder.2']
  #allocation3 [shape = 'u32[2048]{0}', space=vmem, size = 0x2000, scoped, tag = 'scoped memory for transformer_decoder.2']
  #allocation4 [shape = 'u32[2048]{0}', space=vmem, size = 0x2000, scoped, tag = 'scoped memory for transformer_decoder.2']
  #allocation5 [shape = 'u32[2048]{0}', space=vmem, size = 0x2000, scoped, tag = 'scoped memory for transformer_decoder.2']
  #allocation6 [shape = 'u32[2048]{0}', space=vmem, size = 0x2000, scoped, tag = 'scoped memory for transformer_decoder.2']
  #allocation7 [shape = 'u32[2048]{0}', space=vmem, size = 0x2000, scoped, tag = 'scoped memory for transformer_decoder.2']
  #allocation8 [shape = 'u32[2048]{0}', space=vmem, size = 0x2000, scoped, tag = 'scoped memory for transformer_decoder.2']
  #allocation9 [shape = 'u32[2048]{0}', space=vmem, size = 0x2000, scoped, tag = 'scoped memory for transformer_decoder.2']
  #allocation10 [shape = 'u32[2048]{0}', space=vmem, size = 0x2000, scoped, tag = 'scoped memory for transformer_decoder.2']
  #allocation11 [shape = 'u32[2048]{0}', space=vmem, size = 0x2000, scoped, tag = 'scoped memory for transformer_decoder.2']
  #allocation12 [shape = 'u32[2048]{0}', space=vmem, size = 0x2000, scoped, tag = 'scoped memory for transformer_decoder.2']
  #allocation13 [shape = 'u32[2048]{0}', space=vmem, size = 0x2000, scoped, tag = 'scoped memory for transformer_decoder.2']
  #allocation14 [shape = 'u32[2048]{0}', space=vmem, size = 0x2000, scoped, tag = 'scoped memory for transformer_decoder.2']
  #allocation15 [shape = 'u32[2048]{0}', space=vmem, size = 0x2000, scoped, tag = 'scoped memory for transformer_decoder.2']
  #allocation16 [shape = 'u32[2048]{0}', space=vmem, size = 0x2000, scoped, tag = 'scoped memory for transformer_decoder.2']
  #allocation17 [shape = 'u32[2048]{0}', space=vmem, size = 0x2000, scoped, tag = 'scoped memory for transformer_decoder.2']
  #allocation18 [shape = 'u32[2048]{0}', space=vmem, size = 0x2000, scoped, tag = 'scoped memory for transformer_decoder.2']
  #allocation19 [shape = 'u32[2048]{0}', space=vmem, size = 0x2000, scoped, tag = 'scoped memory for transformer_decoder.2']
  #allocation20 [shape = 'u32[2048]{0}', space=vmem, size = 0x2000, scoped, tag = 'scoped memory for transformer_decoder.2']
  #allocation21 [shape = 'u32[2048]{0}', space=vmem, size = 0x2000, scoped, tag = 'scoped memory for transformer_decoder.2']
  #allocation22 [shape = 'u32[2048]{0}', space=vmem, size = 0x2000, scoped, tag = 'scoped memory for transformer_decoder.2']
  #allocation23 [shape = 'u32[2048]{0}', space=vmem, size = 0x2000, scoped, tag = 'scoped memory for transformer_decoder.2']
  #allocation24 [shape = 'u32[2048]{0}', space=vmem, size = 0x2000, scoped, tag = 'scoped memory for transformer_decoder.2']
  #allocation25 [shape = 'u32[2048]{0}', space=vmem, size = 0x2000, scoped, tag = 'scoped memory for transformer_decoder.2']
  #allocation26 [shape = 'u32[2048]{0}', space=vmem, size = 0x2000, scoped, tag = 'scoped memory for transformer_decoder.2']
  %s0 = inlined_call_operand.vmem [shape: f32[160,32], index: 0, kind: input, shape index: {}]
  %s1 = inlined_call_operand.vmem [shape: f32[48,16], index: 1, kind: input, shape index: {}]
  %s2 = inlined_call_operand.vmem [shape: f32[2,48], index: 2, kind: input, shape index: {}]
  %s3 = inlined_call_operand.<no memory space> [shape: f32[], index: 3, kind: input, shape index: {}]
  %s4 = inlined_call_operand.vmem [shape: f32[32,48], index: 4, kind: input, shape index: {}]
  %s5 = inlined_call_operand.vmem [shape: f32[32,48], index: 5, kind: input, shape index: {}]
  %s6 = inlined_call_operand.vmem [shape: f32[32,16], index: 6, kind: input, shape index: {}]
  %s7 = inlined_call_operand.vmem [shape: f32[32,48], index: 7, kind: input, shape index: {}]
  %s8 = inlined_call_operand.vmem [shape: f32[32,48], index: 8, kind: output, shape index: {}]
  %s9 = sld [smem:[#allocation0]]
  $region38: #{transformer_decoder.2} parent=0
    _
  %s11 = ssub.s32 1, %s9
  %s12 = scalar_select 0, %s11, %s9
  %v13 = vstv %s3
  %v14 = vstv %s3
  %v15 = vstv %s3
  %v16 = vstv %s3
  %v17 = vstv %s3
  $region1: #{transformer_decoder.2} parent=0
    #allocation27 [shape = 'u8[16384]{0}', space=vmem, size = 0x4000, dematerialized = true, scoped, tag = 'FusionAdapter Buffer %fusion.6 = f32[32,64]{1,0:T(8,128)} fusion(%param_6.4, %param_3.6, %param_7.2), kind=kLoop, calls=%fused_computation.6.clone, metadata={op_name="jit(transformer_decoder)/concatenate" stack_frame_id=9}']
    #allocation28 [shape = 'u8[36864]{0}', space=vmem, size = 0x9000, dematerialized = true, scoped, tag = 'FusionAdapter Buffer %fusion.1 = f32[66,48]{1,0:T(8,128)} fusion(%param_2.5, %param_3.6, %param_4.3, %param_5.3), kind=kLoop, calls=%fused_computation.1.clone, metadata={op_name="jit(transformer_decoder)/concatenate" stack_frame_id=13}']
    // Predicated region
    $region2: #{transformer_decoder.2} parent=1 // pred_check
      _
    $region3: #{transformer_decoder.2} parent=1 // pred_check_branch
      %19 = sbr.rel (0) target = $region5
    $region4: #{transformer_decoder.2} parent=1 // pred_region
      %s21 = ssub.s32 1, 0
      %s22 = smul.u32 512, %s21
      %p23 = scmp.lt.s32.totalorder 0, 0
      %s24 = scalar_select %p23, 0, 0
      %s25 = smul.addr %s24, 8
      %s26 = scalar_lea.vmem %s6, %s25
      %s28 = ssub.s32 1, 0
      %s29 = smul.u32 512, %s28
    $region5: #{transformer_decoder.2} parent=1 // pred_fallthru
      _
    // Predicated region
    $region6: #{transformer_decoder.2} parent=1 // pred_check
      _
    $region7: #{transformer_decoder.2} parent=1 // pred_check_branch
      %31 = sbr.rel (0) target = $region9
    $region8: #{transformer_decoder.2} parent=1 // pred_region
      _
    $region9: #{transformer_decoder.2} parent=1 // pred_fallthru
      _
    // Predicated region
    $region10: #{transformer_decoder.2} parent=1 // pred_check
      _
    $region11: #{transformer_decoder.2} parent=1 // pred_check_branch
      %33 = sbr.rel (0) target = $region13
    $region12: #{transformer_decoder.2} parent=1 // pred_region
      _
    $region13: #{transformer_decoder.2} parent=1 // pred_fallthru
      _
    // Predicated region
    $region14: #{transformer_decoder.2} parent=1 // pred_check
      _
    $region15: #{transformer_decoder.2} parent=1 // pred_check_branch
      %35 = sbr.rel (0) target = $region17
    $region16: #{transformer_decoder.2} parent=1 // pred_region
      %s37 = ssub.s32 1, 0
      %s38 = smul.u32 32, %s37
      %p39 = scmp.lt.s32.totalorder 0, 0
      %s40 = scalar_select %p39, 0, 0
      %s41 = smul.addr %s40, 2
      %s42 = scalar_lea.vmem %s2, %s41
      %s44 = ssub.s32 1, 0
      %s45 = smul.u32 32, %s44
    $region17: #{transformer_decoder.2} parent=1 // pred_fallthru
      _
    // Predicated region
    $region18: #{transformer_decoder.2} parent=1 // pred_check
      _
    $region19: #{transformer_decoder.2} parent=1 // pred_check_branch
      %47 = sbr.rel (0) target = $region21
    $region20: #{transformer_decoder.2} parent=1 // pred_region
      %s48 = scalar_lea.vmem %s4, 4294967264
    $region21: #{transformer_decoder.2} parent=1 // pred_fallthru
      _
    // Predicated region
    $region22: #{transformer_decoder.2} parent=1 // pred_check
      _
    $region23: #{transformer_decoder.2} parent=1 // pred_check_branch
      %50 = sbr.rel (0) target = $region25
    $region24: #{transformer_decoder.2} parent=1 // pred_region
      _
    $region25: #{transformer_decoder.2} parent=1 // pred_fallthru
      _
    // Predicated region
    $region26: #{transformer_decoder.2} parent=1 // pred_check
      _
    $region27: #{transformer_decoder.2} parent=1 // pred_check_branch
      %52 = sbr.rel (0) target = $region29
    $region28: #{transformer_decoder.2} parent=1 // pred_region
      _
    $region29: #{transformer_decoder.2} parent=1 // pred_fallthru
      _
    %s54 = ssub.s32 1, 0
    %s55 = smul.u32 512, %s54
    %p56 = scmp.lt.s32.totalorder 0, 0
    %s57 = scalar_select %p56, 0, 0
    %s58 = smul.addr %s57, 8
    %s59 = scalar_lea.vmem %s6, %s58
    %s61 = ssub.s32 1, 0
    %s62 = smul.u32 32, %s61
    %p63 = scmp.lt.s32.totalorder 0, 0
    %s64 = scalar_select %p63, 0, 0
    %s65 = smul.addr %s64, 2
    %s66 = scalar_lea.vmem %s2, %s65
    %s67 = scalar_lea.vmem %s4, 4294967264
    %s69 = ssub.s32 1, 0
    %s70 = smul.u32 512, %s69
    %p71 = scmp.lt.s32.totalorder 0, 0
    %s72 = scalar_select %p71, 0, 0
    %s73 = smul.addr %s72, 8
    %s74 = scalar_lea.vmem %s6, %s73
    %s76 = ssub.s32 1, 0
    %s77 = smul.u32 512, %s76
    %s79 = ssub.s32 1, 0
    %s80 = smul.u32 32, %s79
    %p81 = scmp.lt.s32.totalorder 0, 0
    %s82 = scalar_select %p81, 0, 0
    %s83 = smul.addr %s82, 2
    %s84 = scalar_lea.vmem %s2, %s83
    %s86 = ssub.s32 1, 0
    %s87 = smul.u32 32, %s86
    %s88 = scalar_lea.vmem %s4, 4294967264
    %s89 = ssub.s32 0, 0
    %p90 = scmp.lt.s32.totalorder %s89, 0
    %s91 = scalar_select %p90, 0, 255
    %v92 = vld [vmem:[%s74] sm:%s91]
    %v93 = vlaneseq
    %v94 = vand.u32 %v93, 127
    %v95 = vadd.s32 %v94, 128
    %vm96 = vcmp.lt.s32.totalorder %v95, 144
    %v97 = vsel %vm96, %v92, %v13
    %v98 = vlaneseq
    %v99 = vand.u32 %v98, 127
    %vm100 = vcmp.lt.s32.totalorder %v99, 80
    %v101 = vsel %vm100, %v97, %v13
    %102 = vrot.lane.b32.xlu0 %v101, 48
    %v103 = vpop.permute.xlu0 %102
    %v104 = vld [vmem:[%s7] sm:$0xff]
    %v105 = vlaneseq
    %v106 = vand.u32 %v105, 127
    %vm108 = vcmp.lt.s32.totalorder %v106, 48
    %v109 = vsel %vm108, %v104, %v14
    %110 = xla_tuple %v109, %v103
    %111 = xla_tuple %110
    %v112 = vmax.f32 %v109, %v103
    %113 = xla_tuple %v112
    %115 = vst [vmem:[#allocation27] sm:$0xff] %v112
    %s116 = scalar_lea.vmem %s74, 8
    %s117 = ssub.s32 0, 0
    %p118 = scmp.lt.s32.totalorder %s117, 0
    %s119 = scalar_select %p118, 0, 255
    %v120 = vld [vmem:[%s116] sm:%s119]
    %s121 = scalar_lea.vmem %s74, 8
    %v122 = vlaneseq
    %v123 = vand.u32 %v122, 127
    %v124 = vadd.s32 %v123, 128
    %vm125 = vcmp.lt.s32.totalorder %v124, 144
    %v126 = vsel %vm125, %v120, %v13
    %v127 = vlaneseq
    %v128 = vand.u32 %v127, 127
    %vm129 = vcmp.lt.s32.totalorder %v128, 80
    %v130 = vsel %vm129, %v126, %v13
    %131 = vrot.lane.b32.xlu0 %v130, 48
    %v132 = vpop.permute.xlu0 %131
    %s133 = scalar_lea.vmem %s7, 8
    %v134 = vld [vmem:[%s133] sm:$0xff]
    %v135 = vlaneseq
    %v136 = vand.u32 %v135, 127
    %vm138 = vcmp.lt.s32.totalorder %v136, 48
    %v139 = vsel %vm138, %v134, %v14
    %140 = xla_tuple %v139, %v132
    %141 = xla_tuple %140
    %v142 = vmax.f32 %v139, %v132
    %143 = xla_tuple %v142
    %s144 = scalar_lea.vmem [#allocation27], 8
    %146 = vst [vmem:[%s144] sm:$0xff] %v142
    %s147 = scalar_lea.vmem %s74, 16
    %s148 = ssub.s32 0, 0
    %p149 = scmp.lt.s32.totalorder %s148, 0
    %s150 = scalar_select %p149, 0, 255
    %v151 = vld [vmem:[%s147] sm:%s150]
    %s152 = scalar_lea.vmem %s74, 16
    %v153 = vlaneseq
    %v154 = vand.u32 %v153, 127
    %v155 = vadd.s32 %v154, 128
    %vm156 = vcmp.lt.s32.totalorder %v155, 144
    %v157 = vsel %vm156, %v151, %v13
    %v158 = vlaneseq
    %v159 = vand.u32 %v158, 127
    %vm160 = vcmp.lt.s32.totalorder %v159, 80
    %v161 = vsel %vm160, %v157, %v13
    %162 = vrot.lane.b32.xlu0 %v161, 48
    %v163 = vpop.permute.xlu0 %162
    %s164 = scalar_lea.vmem %s7, 16
    %v165 = vld [vmem:[%s164] sm:$0xff]
    %v166 = vlaneseq
    %v167 = vand.u32 %v166, 127
    %vm169 = vcmp.lt.s32.totalorder %v167, 48
    %v170 = vsel %vm169, %v165, %v14
    %171 = xla_tuple %v170, %v163
    %172 = xla_tuple %171
    %v173 = vmax.f32 %v170, %v163
    %174 = xla_tuple %v173
    %s175 = scalar_lea.vmem [#allocation27], 16
    %177 = vst [vmem:[%s175] sm:$0xff] %v173
    %s178 = scalar_lea.vmem %s74, 24
    %s179 = ssub.s32 0, 0
    %p180 = scmp.lt.s32.totalorder %s179, 0
    %s181 = scalar_select %p180, 0, 255
    %v182 = vld [vmem:[%s178] sm:%s181]
    %s183 = scalar_lea.vmem %s74, 24
    %v184 = vlaneseq
    %v185 = vand.u32 %v184, 127
    %v186 = vadd.s32 %v185, 128
    %vm187 = vcmp.lt.s32.totalorder %v186, 144
    %v188 = vsel %vm187, %v182, %v13
    %v189 = vlaneseq
    %v190 = vand.u32 %v189, 127
    %vm191 = vcmp.lt.s32.totalorder %v190, 80
    %v192 = vsel %vm191, %v188, %v13
    %193 = vrot.lane.b32.xlu0 %v192, 48
    %v194 = vpop.permute.xlu0 %193
    %s195 = scalar_lea.vmem %s7, 24
    %v196 = vld [vmem:[%s195] sm:$0xff]
    %v197 = vlaneseq
    %v198 = vand.u32 %v197, 127
    %vm200 = vcmp.lt.s32.totalorder %v198, 48
    %v201 = vsel %vm200, %v196, %v14
    %202 = xla_tuple %v201, %v194
    %203 = xla_tuple %202
    %v204 = vmax.f32 %v201, %v194
    %205 = xla_tuple %v204
    %s206 = scalar_lea.vmem [#allocation27], 24
    %208 = vst [vmem:[%s206] sm:$0xff] %v204
    %s209 = ssub.s32 0, 0
    %p210 = scmp.lt.s32.totalorder %s209, 0
    %s211 = scalar_select %p210, 0, 255
    %s212 = sand.u32 3, %s211
    %s213 = sand.u32 3, %s212
    %v214 = vld [vmem:[%s84] sm:%s213]
    %v215 = vld [vmem:[%s5] sm:$0xff]
    %v216 = vlaneseq
    %v217 = vand.u32 %v216, 127
    %vm219 = vcmp.lt.s32.totalorder %v217, 48
    %v220 = vsel %vm219, %v215, %v17
    %221 = xla_tuple %v220, %v16
    %222 = xla_tuple %221
    %v223 = vmax.f32 %v220, %v16
    %224 = xla_tuple %v223
    %225 = xla_tuple %v223, %v15
    %226 = xla_tuple %225
    %v227 = vmax.f32 %v223, %v15
    %228 = xla_tuple %v227
    %230 = vst [vmem:[#allocation28] sm:$0xff] %v227
    %s231 = scalar_lea.vmem %s88, 8
    %s232 = scalar_lea.vmem %s5, 8
    %v233 = vld [vmem:[%s232] sm:$0xff]
    %v234 = vlaneseq
    %v235 = vand.u32 %v234, 127
    %vm237 = vcmp.lt.s32.totalorder %v235, 48
    %v238 = vsel %vm237, %v233, %v17
    %239 = xla_tuple %v238, %v16
    %240 = xla_tuple %239
    %v241 = vmax.f32 %v238, %v16
    %242 = xla_tuple %v241
    %243 = xla_tuple %v241, %v15
    %244 = xla_tuple %243
    %v245 = vmax.f32 %v241, %v15
    %246 = xla_tuple %v245
    %s247 = scalar_lea.vmem [#allocation28], 8
    %249 = vst [vmem:[%s247] sm:$0xff] %v245
    %s250 = scalar_lea.vmem %s88, 16
    %s251 = scalar_lea.vmem %s5, 16
    %v252 = vld [vmem:[%s251] sm:$0xff]
    %v253 = vlaneseq
    %v254 = vand.u32 %v253, 127
    %vm256 = vcmp.lt.s32.totalorder %v254, 48
    %v257 = vsel %vm256, %v252, %v17
    %258 = xla_tuple %v257, %v16
    %259 = xla_tuple %258
    %v260 = vmax.f32 %v257, %v16
    %261 = xla_tuple %v260
    %262 = xla_tuple %v260, %v15
    %263 = xla_tuple %262
    %v264 = vmax.f32 %v260, %v15
    %265 = xla_tuple %v264
    %s266 = scalar_lea.vmem [#allocation28], 16
    %268 = vst [vmem:[%s266] sm:$0xff] %v264
    %s269 = scalar_lea.vmem %s88, 24
    %s270 = scalar_lea.vmem %s5, 24
    %v271 = vld [vmem:[%s270] sm:$0xff]
    %v272 = vlaneseq
    %v273 = vand.u32 %v272, 127
    %vm275 = vcmp.lt.s32.totalorder %v273, 48
    %v276 = vsel %vm275, %v271, %v17
    %277 = xla_tuple %v276, %v16
    %278 = xla_tuple %277
    %v279 = vmax.f32 %v276, %v16
    %280 = xla_tuple %v279
    %281 = xla_tuple %v279, %v15
    %282 = xla_tuple %281
    %v283 = vmax.f32 %v279, %v15
    %284 = xla_tuple %v283
    %s285 = scalar_lea.vmem [#allocation28], 24
    %287 = vst [vmem:[%s285] sm:$0xff] %v283
    %s288 = scalar_lea.vmem %s88, 32
    %v289 = vld [vmem:[%s288] sm:$0xff]
    %v290 = vlaneseq
    %v291 = vand.u32 %v290, 127
    %vm293 = vcmp.lt.s32.totalorder %v291, 48
    %v294 = vsel %vm293, %v289, %v16
    %295 = xla_tuple %v17, %v294
    %296 = xla_tuple %295
    %v297 = vmax.f32 %v17, %v294
    %298 = xla_tuple %v297
    %299 = xla_tuple %v297, %v15
    %300 = xla_tuple %299
    %v301 = vmax.f32 %v297, %v15
    %302 = xla_tuple %v301
    %s303 = scalar_lea.vmem [#allocation28], 32
    %305 = vst [vmem:[%s303] sm:$0xff] %v301
    %s306 = scalar_lea.vmem %s88, 40
    %v307 = vld [vmem:[%s306] sm:$0xff]
    %v308 = vlaneseq
    %v309 = vand.u32 %v308, 127
    %vm311 = vcmp.lt.s32.totalorder %v309, 48
    %v312 = vsel %vm311, %v307, %v16
    %313 = xla_tuple %v17, %v312
    %314 = xla_tuple %313
    %v315 = vmax.f32 %v17, %v312
    %316 = xla_tuple %v315
    %317 = xla_tuple %v315, %v15
    %318 = xla_tuple %317
    %v319 = vmax.f32 %v315, %v15
    %320 = xla_tuple %v319
    %s321 = scalar_lea.vmem [#allocation28], 40
    %323 = vst [vmem:[%s321] sm:$0xff] %v319
    %s324 = scalar_lea.vmem %s88, 48
    %v325 = vld [vmem:[%s324] sm:$0xff]
    %v326 = vlaneseq
    %v327 = vand.u32 %v326, 127
    %vm329 = vcmp.lt.s32.totalorder %v327, 48
    %v330 = vsel %vm329, %v325, %v16
    %331 = xla_tuple %v17, %v330
    %332 = xla_tuple %331
    %v333 = vmax.f32 %v17, %v330
    %334 = xla_tuple %v333
    %335 = xla_tuple %v333, %v15
    %336 = xla_tuple %335
    %v337 = vmax.f32 %v333, %v15
    %338 = xla_tuple %v337
    %s339 = scalar_lea.vmem [#allocation28], 48
    %341 = vst [vmem:[%s339] sm:$0xff] %v337
    %s342 = scalar_lea.vmem %s88, 56
    %v343 = vld [vmem:[%s342] sm:$0xff]
    %v344 = vlaneseq
    %v345 = vand.u32 %v344, 127
    %vm347 = vcmp.lt.s32.totalorder %v345, 48
    %v348 = vsel %vm347, %v343, %v16
    %349 = xla_tuple %v17, %v348
    %350 = xla_tuple %349
    %v351 = vmax.f32 %v17, %v348
    %352 = xla_tuple %v351
    %353 = xla_tuple %v351, %v15
    %354 = xla_tuple %353
    %v355 = vmax.f32 %v351, %v15
    %356 = xla_tuple %v355
    %s357 = scalar_lea.vmem [#allocation28], 56
    %359 = vst [vmem:[%s357] sm:$0xff] %v355
    %v360 = vlaneseq
    %v361 = vshrl.u32 %v360, 7
    %v362 = vadd.s32 %v361, 64
    %vm363 = vcmp.lt.s32.totalorder %v362, 66
    %v364 = vsel %vm363, %v214, %v15
    %v365 = vlaneseq
    %v366 = vand.u32 %v365, 127
    %vm368 = vcmp.lt.s32.totalorder %v366, 48
    %v369 = vsel %vm368, %v364, %v15
    %370 = xla_tuple %v17, %v16
    %371 = xla_tuple %370
    %v372 = vmax.f32 %v17, %v16
    %373 = xla_tuple %v372
    %374 = xla_tuple %v372, %v369
    %375 = xla_tuple %374
    %v376 = vmax.f32 %v372, %v369
    %377 = xla_tuple %v376
    %s378 = scalar_lea.vmem [#allocation28], 64
    %380 = vst [vmem:[%s378] sm:$0xff] %v376
    %v381 = vld [vmem:[#allocation27] sm:$0xff]
    %v382 = vld [vmem:[#allocation27 + $0x8] sm:$0xff]
    %v383 = vld [vmem:[#allocation27 + $0x10] sm:$0xff]
    %v384 = vld [vmem:[#allocation27 + $0x18] sm:$0xff]
    %v385 = vld [vmem:[%s0] sm:$0xff]
    %v386 = vld [vmem:[%s0 + $0x8] sm:$0xff]
    %v387 = vld [vmem:[%s0 + $0x10] sm:$0xff]
    %v388 = vld [vmem:[%s0 + $0x18] sm:$0xff]
    %v389 = vld [vmem:[%s0 + $0x20] sm:$0xff]
    %v390 = vld [vmem:[%s0 + $0x28] sm:$0xff]
    %v391 = vld [vmem:[%s0 + $0x30] sm:$0xff]
    %v392 = vld [vmem:[%s0 + $0x38] sm:$0xff]
    %v393 = vld [vmem:[%s0 + $0x40] sm:$0xff]
    %v394 = vld [vmem:[%s0 + $0x48] sm:$0xff]
    %v395 = vld [vmem:[%s0 + $0x50] sm:$0xff]
    %v396 = vld [vmem:[%s0 + $0x58] sm:$0xff]
    %v397 = vld [vmem:[%s0 + $0x60] sm:$0xff]
    %v398 = vld [vmem:[%s0 + $0x68] sm:$0xff]
    %v399 = vld [vmem:[%s0 + $0x70] sm:$0xff]
    %v400 = vld [vmem:[%s0 + $0x78] sm:$0xff]
    %v401 = vld [vmem:[%s0 + $0x80] sm:$0xff]
    %v402 = vld [vmem:[%s0 + $0x88] sm:$0xff]
    %v403 = vld [vmem:[%s0 + $0x90] sm:$0xff]
    %v404 = vld [vmem:[%s0 + $0x98] sm:$0xff]
    %v405 = vld [vmem:[#allocation28] sm:$0xff]
    %v406 = vld [vmem:[#allocation28 + $0x8] sm:$0xff]
    %v407 = vld [vmem:[#allocation28 + $0x10] sm:$0xff]
    %v408 = vld [vmem:[#allocation28 + $0x18] sm:$0xff]
    %v409 = vld [vmem:[#allocation28 + $0x20] sm:$0xff]
    %v410 = vld [vmem:[#allocation28 + $0x28] sm:$0xff]
    %v411 = vld [vmem:[#allocation28 + $0x30] sm:$0xff]
    %v412 = vld [vmem:[#allocation28 + $0x38] sm:$0xff]
    %v413 = vld [vmem:[#allocation28 + $0x40] sm:$0x3]
    %v414 = vld [vmem:[%s1] sm:$0xff]
    %v415 = vld [vmem:[%s1 + $0x8] sm:$0xff]
    %v416 = vld [vmem:[%s1 + $0x10] sm:$0xff]
    %v417 = vld [vmem:[%s1 + $0x18] sm:$0xff]
    %v418 = vld [vmem:[%s1 + $0x20] sm:$0xff]
    %v419 = vld [vmem:[%s1 + $0x28] sm:$0xff]
    %vm420 = vcmask 261120
    %v422 = vsel %vm420, %v385, 0
    %v425 = vsel %vm420, %v386, 0
    %v428 = vsel %vm420, %v387, 0
    %v431 = vsel %vm420, %v388, 0
    %v434 = vsel %vm420, %v389, 0
    %v437 = vsel %vm420, %v390, 0
    %v440 = vsel %vm420, %v391, 0
    %v443 = vsel %vm420, %v392, 0
    %v446 = vsel %vm420, %v393, 0
    %v449 = vsel %vm420, %v394, 0
    %v452 = vsel %vm420, %v395, 0
    %v455 = vsel %vm420, %v396, 0
    %457 = vmatprep.subr.mxu0 0.0
    %458 = vmatpush1.msra.mxu0 %v381
    %459 = vmatprep.subr.mxu0 0.0
    %460 = vmatpush1.msra.mxu0 %v382
    %461 = vmatprep.subr.mxu0 0.0
    %462 = vmatpush1.msra.mxu0 %v383
    %463 = vmatprep.subr.mxu0 0.0
    %464 = vmatpush1.msra.mxu0 %v384
    %465 = vmatprep.subr.mxu0 0.0
    %466 = vmatpush1.msra.mxu0 0.0
    %467 = vmatprep.subr.mxu0 0.0
    %468 = vmatpush1.msra.mxu0 0.0
    %469 = vmatprep.subr.mxu0 0.0
    %470 = vmatpush1.msra.mxu0 0.0
    %471 = vmatprep.subr.mxu0 0.0
    %472 = vmatpush1.msra.mxu0 0.0
    %473 = vmatprep.subr.mxu0 0.0
    %474 = vmatpush1.msra.mxu0 0.0
    %475 = vmatprep.subr.mxu0 0.0
    %476 = vmatpush1.msra.mxu0 0.0
    %477 = vmatprep.subr.mxu0 0.0
    %478 = vmatpush1.msra.mxu0 0.0
    %479 = vmatprep.subr.mxu0 0.0
    %480 = vmatpush1.msra.mxu0 0.0
    %481 = vmatprep.subr.mxu0 0.0
    %482 = vmatpush1.msra.mxu0 0.0
    %483 = vmatprep.subr.mxu0 0.0
    %484 = vmatpush1.msra.mxu0 0.0
    %485 = vmatprep.subr.mxu0 0.0
    %486 = vmatpush1.msra.mxu0 0.0
    %487 = vmatprep.subr.mxu0 0.0
    %488 = vmatpush1.msra.mxu0 0.0
    %489 = vmatprep.subr.mxu0 0.0
    %490 = vmatpush1.msra.mxu0 0.0
    %491 = vmatprep.subr.mxu0 0.0
    %492 = vmatpush1.msra.mxu0 0.0
    %493 = vmatprep.subr.mxu0 0.0
    %494 = vmatpush1.msra.mxu0 0.0
    %495 = vmatprep.subr.mxu0 0.0
    %496 = vmatpush1.msra.mxu0 0.0
    %497 = vmatprep.subr.mxu0 0.0
    %498 = vmatpush1.msra.mxu0 0.0
    %499 = vmatprep.subr.mxu0 0.0
    %500 = vmatpush1.msra.mxu0 0.0
    %501 = vmatprep.subr.mxu0 0.0
    %502 = vmatpush1.msra.mxu0 0.0
    %503 = vmatprep.subr.mxu0 0.0
    %504 = vmatpush1.msra.mxu0 0.0
    %505 = vmatprep.subr.mxu0 0.0
    %506 = vmatpush1.msra.mxu0 0.0
    %507 = vmatprep.subr.mxu0 0.0
    %508 = vmatpush1.msra.mxu0 0.0
    %509 = vmatprep.subr.mxu0 0.0
    %510 = vmatpush1.msra.mxu0 0.0
    %511 = vmatprep.subr.mxu0 0.0
    %512 = vmatpush1.msra.mxu0 0.0
    %513 = vmatprep.subr.mxu0 0.0
    %514 = vmatpush1.msra.mxu0 0.0
    %515 = vmatprep.subr.mxu0 0.0
    %516 = vmatpush1.msra.mxu0 0.0
    %517 = vmatprep.subr.mxu0 0.0
    %518 = vmatpush1.msra.mxu0 0.0
    %519 = vmatprep.subr.mxu0 0.0
    %520 = vmatpush1.msra.mxu0 0.0
    %521 = vmatprep.mubr.f32.mxu0 0.0
    %522 = vmatmul.mubr.f32.gmra.mrb[0].mxu0 %v422
    %v523 = vpop.f32.mrb[0].mxu0
    %v524 = vadd.f32 0.0, %v523
    %v525 = vpop.f32.mrb[0].mxu0
    %526 = vmatprep.mubr.f32.mxu0 0.0
    %527 = vmatmul.mubr.f32.gmra.mrb[0].mxu0 %v425
    %v528 = vpop.f32.mrb[0].mxu0
    %v529 = vadd.f32 0.0, %v528
    %v530 = vpop.f32.mrb[0].mxu0
    %531 = vmatprep.mubr.f32.mxu0 0.0
    %532 = vmatmul.mubr.f32.gmra.mrb[0].mxu0 %v428
    %v533 = vpop.f32.mrb[0].mxu0
    %v534 = vadd.f32 0.0, %v533
    %v535 = vpop.f32.mrb[0].mxu0
    %536 = vmatprep.mubr.f32.mxu0 0.0
    %537 = vmatmul.mubr.f32.gmra.mrb[0].mxu0 %v431
    %v538 = vpop.f32.mrb[0].mxu0
    %v539 = vadd.f32 0.0, %v538
    %v540 = vpop.f32.mrb[0].mxu0
    %541 = vmatprep.mubr.f32.mxu0 0.0
    %542 = vmatmul.mubr.f32.gmra.mrb[0].mxu0 %v434
    %v543 = vpop.f32.mrb[0].mxu0
    %v544 = vadd.f32 0.0, %v543
    %v545 = vpop.f32.mrb[0].mxu0
    %546 = vmatprep.mubr.f32.mxu0 0.0
    %547 = vmatmul.mubr.f32.gmra.mrb[0].mxu0 %v437
    %v548 = vpop.f32.mrb[0].mxu0
    %v549 = vadd.f32 0.0, %v548
    %v550 = vpop.f32.mrb[0].mxu0
    %551 = vmatprep.mubr.f32.mxu0 0.0
    %552 = vmatmul.mubr.f32.gmra.mrb[0].mxu0 %v440
    %v553 = vpop.f32.mrb[0].mxu0
    %v554 = vadd.f32 0.0, %v553
    %v555 = vpop.f32.mrb[0].mxu0
    %556 = vmatprep.mubr.f32.mxu0 0.0
    %557 = vmatmul.mubr.f32.gmra.mrb[0].mxu0 %v443
    %v558 = vpop.f32.mrb[0].mxu0
    %v559 = vadd.f32 0.0, %v558
    %v560 = vpop.f32.mrb[0].mxu0
    %561 = vmatprep.mubr.f32.mxu0 0.0
    %562 = vmatmul.mubr.f32.gmra.mrb[0].mxu0 %v446
    %v563 = vpop.f32.mrb[0].mxu0
    %v564 = vadd.f32 0.0, %v563
    %v565 = vpop.f32.mrb[0].mxu0
    %566 = vmatprep.mubr.f32.mxu0 0.0
    %567 = vmatmul.mubr.f32.gmra.mrb[0].mxu0 %v449
    %v568 = vpop.f32.mrb[0].mxu0
    %v569 = vadd.f32 0.0, %v568
    %v570 = vpop.f32.mrb[0].mxu0
    %571 = vmatprep.mubr.f32.mxu0 0.0
    %572 = vmatmul.mubr.f32.gmra.mrb[0].mxu0 %v452
    %v573 = vpop.f32.mrb[0].mxu0
    %v574 = vadd.f32 0.0, %v573
    %v575 = vpop.f32.mrb[0].mxu0
    %576 = vmatprep.mubr.f32.mxu0 0.0
    %577 = vmatmul.mubr.f32.gmra.mrb[0].mxu0 %v455
    %v578 = vpop.f32.mrb[0].mxu0
    %v579 = vadd.f32 0.0, %v578
    %v580 = vpop.f32.mrb[0].mxu0
    %581 = vdwg.mxu0
    %582 = vxpose.xlu0.b32.start [1/16] %v524, 128
    %583 = vxpose.xlu0.b32.cont [2/16] %v529, 128
    %584 = vxpose.xlu0.b32.cont [3/16] %v534, 128
    %585 = vxpose.xlu0.b32.cont [4/16] %v539, 128
    %586 = vxpose.xlu0.b32.cont [5/16] 0.0, 128
    %587 = vxpose.xlu0.b32.cont [6/16] 0.0, 128
    %588 = vxpose.xlu0.b32.cont [7/16] 0.0, 128
    %589 = vxpose.xlu0.b32.cont [8/16] 0.0, 128
    %590 = vxpose.xlu0.b32.cont [9/16] 0.0, 128
    %591 = vxpose.xlu0.b32.cont [10/16] 0.0, 128
    %592 = vxpose.xlu0.b32.cont [11/16] 0.0, 128
    %593 = vxpose.xlu0.b32.cont [12/16] 0.0, 128
    %594 = vxpose.xlu0.b32.cont [13/16] 0.0, 128
    %595 = vxpose.xlu0.b32.cont [14/16] 0.0, 128
    %596 = vxpose.xlu0.b32.cont [15/16] 0.0, 128
    %597 = vxpose.xlu0.b32.end [16/16] 0.0, 128
    %v598 = vpop.trf.xlu0
    %v599 = vpop.trf.xlu0
    %v600 = vpop.trf.xlu0
    %v601 = vpop.trf.xlu0
    %v602 = vpop.trf.xlu0
    %v603 = vpop.trf.xlu0
    %v604 = vpop.trf.xlu0
    %v605 = vpop.trf.xlu0
    %v606 = vpop.trf.xlu0
    %v607 = vpop.trf.xlu0
    %v608 = vpop.trf.xlu0
    %v609 = vpop.trf.xlu0
    %v610 = vpop.trf.xlu0
    %v611 = vpop.trf.xlu0
    %v612 = vpop.trf.xlu0
    %v613 = vpop.trf.xlu0
    %618 = vrot.lane.b32.xlu0 %v544, 80
    %v619 = vpop.permute.xlu0 %618
    %620 = vrot.lane.b32.xlu0 %v549, 80
    %v621 = vpop.permute.xlu0 %620
    %622 = vrot.lane.b32.xlu0 %v554, 80
    %v623 = vpop.permute.xlu0 %622
    %624 = vrot.lane.b32.xlu0 %v559, 80
    %v625 = vpop.permute.xlu0 %624
    %v631 = vsel %vm420, %v598, 0
    %v634 = vsel %vm420, %v599, 0
    %v637 = vsel %vm420, %v600, 0
    %v640 = vsel %vm420, %v601, 0
    %v643 = vsel %vm420, %v602, 0
    %v646 = vsel %vm420, %v603, 0
    %648 = vmatprep.subr.mxu0 0.0
    %649 = vmatpush1.msra.mxu0 %v619
    %650 = vmatprep.subr.mxu0 0.0
    %651 = vmatpush1.msra.mxu0 %v621
    %652 = vmatprep.subr.mxu0 0.0
    %653 = vmatpush1.msra.mxu0 %v623
    %654 = vmatprep.subr.mxu0 0.0
    %655 = vmatpush1.msra.mxu0 %v625
    %656 = vmatprep.subr.mxu0 0.0
    %657 = vmatpush1.msra.mxu0 0.0
    %658 = vmatprep.subr.mxu0 0.0
    %659 = vmatpush1.msra.mxu0 0.0
    %660 = vmatprep.subr.mxu0 0.0
    %661 = vmatpush1.msra.mxu0 0.0
    %662 = vmatprep.subr.mxu0 0.0
    %663 = vmatpush1.msra.mxu0 0.0
    %664 = vmatprep.subr.mxu0 0.0
    %665 = vmatpush1.msra.mxu0 0.0
    %666 = vmatprep.subr.mxu0 0.0
    %667 = vmatpush1.msra.mxu0 0.0
    %668 = vmatprep.subr.mxu0 0.0
    %669 = vmatpush1.msra.mxu0 0.0
    %670 = vmatprep.subr.mxu0 0.0
    %671 = vmatpush1.msra.mxu0 0.0
    %672 = vmatprep.subr.mxu0 0.0
    %673 = vmatpush1.msra.mxu0 0.0
    %674 = vmatprep.subr.mxu0 0.0
    %675 = vmatpush1.msra.mxu0 0.0
    %676 = vmatprep.subr.mxu0 0.0
    %677 = vmatpush1.msra.mxu0 0.0
    %678 = vmatprep.subr.mxu0 0.0
    %679 = vmatpush1.msra.mxu0 0.0
    %680 = vmatprep.subr.mxu0 0.0
    %681 = vmatpush1.msra.mxu0 0.0
    %682 = vmatprep.subr.mxu0 0.0
    %683 = vmatpush1.msra.mxu0 0.0
    %684 = vmatprep.subr.mxu0 0.0
    %685 = vmatpush1.msra.mxu0 0.0
    %686 = vmatprep.subr.mxu0 0.0
    %687 = vmatpush1.msra.mxu0 0.0
    %688 = vmatprep.subr.mxu0 0.0
    %689 = vmatpush1.msra.mxu0 0.0
    %690 = vmatprep.subr.mxu0 0.0
    %691 = vmatpush1.msra.mxu0 0.0
    %692 = vmatprep.subr.mxu0 0.0
    %693 = vmatpush1.msra.mxu0 0.0
    %694 = vmatprep.subr.mxu0 0.0
    %695 = vmatpush1.msra.mxu0 0.0
    %696 = vmatprep.subr.mxu0 0.0
    %697 = vmatpush1.msra.mxu0 0.0
    %698 = vmatprep.subr.mxu0 0.0
    %699 = vmatpush1.msra.mxu0 0.0
    %700 = vmatprep.subr.mxu0 0.0
    %701 = vmatpush1.msra.mxu0 0.0
    %702 = vmatprep.subr.mxu0 0.0
    %703 = vmatpush1.msra.mxu0 0.0
    %704 = vmatprep.subr.mxu0 0.0
    %705 = vmatpush1.msra.mxu0 0.0
    %706 = vmatprep.subr.mxu0 0.0
    %707 = vmatpush1.msra.mxu0 0.0
    %708 = vmatprep.subr.mxu0 0.0
    %709 = vmatpush1.msra.mxu0 0.0
    %710 = vmatprep.subr.mxu0 0.0
    %711 = vmatpush1.msra.mxu0 0.0
    %712 = vmatprep.mubr.f32.mxu0 0.0
    %713 = vmatmul.mubr.f32.gmra.mrb[0].mxu0 %v631
    %v714 = vpop.f32.mrb[0].mxu0
    %v715 = vadd.f32 0.0, %v714
    %v716 = vpop.f32.mrb[0].mxu0
    %717 = vmatprep.mubr.f32.mxu0 0.0
    %718 = vmatmul.mubr.f32.gmra.mrb[0].mxu0 %v634
    %v719 = vpop.f32.mrb[0].mxu0
    %v720 = vadd.f32 0.0, %v719
    %v721 = vpop.f32.mrb[0].mxu0
    %722 = vmatprep.mubr.f32.mxu0 0.0
    %723 = vmatmul.mubr.f32.gmra.mrb[0].mxu0 %v637
    %v724 = vpop.f32.mrb[0].mxu0
    %v725 = vadd.f32 0.0, %v724
    %v726 = vpop.f32.mrb[0].mxu0
    %727 = vmatprep.mubr.f32.mxu0 0.0
    %728 = vmatmul.mubr.f32.gmra.mrb[0].mxu0 %v640
    %v729 = vpop.f32.mrb[0].mxu0
    %v730 = vadd.f32 0.0, %v729
    %v731 = vpop.f32.mrb[0].mxu0
    %732 = vmatprep.mubr.f32.mxu0 0.0
    %733 = vmatmul.mubr.f32.gmra.mrb[0].mxu0 %v643
    %v734 = vpop.f32.mrb[0].mxu0
    %v735 = vadd.f32 0.0, %v734
    %v736 = vpop.f32.mrb[0].mxu0
    %737 = vmatprep.mubr.f32.mxu0 0.0
    %738 = vmatmul.mubr.f32.gmra.mrb[0].mxu0 %v646
    %v739 = vpop.f32.mrb[0].mxu0
    %v740 = vadd.f32 0.0, %v739
    %v741 = vpop.f32.mrb[0].mxu0
    %742 = vdwg.mxu0
    %v743 = vmul.f32 %v715, 0.17677669
    %v744 = vmul.f32 %v720, 0.17677669
    %v745 = vmul.f32 %v725, 0.17677669
    %v746 = vmul.f32 %v730, 0.17677669
    %v747 = vmul.f32 %v735, 0.17677669
    %v748 = vmul.f32 %v740, 0.17677669
    %v749 = vadd.f32 %v743, %v414
    %v750 = vadd.f32 %v744, %v415
    %v751 = vadd.f32 %v745, %v416
    %v752 = vadd.f32 %v746, %v417
    %v753 = vadd.f32 %v747, %v418
    %v754 = vadd.f32 %v748, %v419
    %vm755 = vcmask 130048
    %v756 = vsel %vm755, %v749, -inf
    %757 = vmax.xlane.f32.xlu0 %v756
    %v758 = vpop.xlane.xlu0 %757
    %v759 = vsel %vm755, %v750, -inf
    %760 = vmax.xlane.f32.xlu0 %v759
    %v761 = vpop.xlane.xlu0 %760
    %v762 = vsel %vm755, %v751, -inf
    %763 = vmax.xlane.f32.xlu0 %v762
    %v764 = vpop.xlane.xlu0 %763
    %v765 = vsel %vm755, %v752, -inf
    %766 = vmax.xlane.f32.xlu0 %v765
    %v767 = vpop.xlane.xlu0 %766
    %v768 = vsel %vm755, %v753, -inf
    %769 = vmax.xlane.f32.xlu0 %v768
    %v770 = vpop.xlane.xlu0 %769
    %v771 = vsel %vm755, %v754, -inf
    %772 = vmax.xlane.f32.xlu0 %v771
    %v773 = vpop.xlane.xlu0 %772
    %v774 = vsub.f32 %v749, %v758
    %v775 = vsub.f32 %v750, %v761
    %v776 = vsub.f32 %v751, %v764
    %v777 = vsub.f32 %v752, %v767
    %v778 = vsub.f32 %v753, %v770
    %v779 = vsub.f32 %v754, %v773
    %v780 = vmul.f32 %v774, 1.442695
    %v781 = vpow.pop %v780
    %v782 = vmul.f32 %v775, 1.442695
    %v783 = vpow.pop %v782
    %v784 = vmul.f32 %v776, 1.442695
    %v785 = vpow.pop %v784
    %v786 = vmul.f32 %v777, 1.442695
    %v787 = vpow.pop %v786
    %v788 = vmul.f32 %v778, 1.442695
    %v789 = vpow.pop %v788
    %v790 = vmul.f32 %v779, 1.442695
    %v791 = vpow.pop %v790
    %v792 = vsel %vm755, %v781, 0.0
    %793 = vadd.xlane.f32.xlu0 %v792
    %v794 = vpop.xlane.xlu0 %793
    %v795 = vsel %vm755, %v783, 0.0
    %796 = vadd.xlane.f32.xlu0 %v795
    %v797 = vpop.xlane.xlu0 %796
    %v798 = vsel %vm755, %v785, 0.0
    %799 = vadd.xlane.f32.xlu0 %v798
    %v800 = vpop.xlane.xlu0 %799
    %v801 = vsel %vm755, %v787, 0.0
    %802 = vadd.xlane.f32.xlu0 %v801
    %v803 = vpop.xlane.xlu0 %802
    %v804 = vsel %vm755, %v789, 0.0
    %805 = vadd.xlane.f32.xlu0 %v804
    %v806 = vpop.xlane.xlu0 %805
    %v807 = vsel %vm755, %v791, 0.0
    %808 = vadd.xlane.f32.xlu0 %v807
    %v809 = vpop.xlane.xlu0 %808
    %v810 = vrcp.pop %v794
    %v811 = vrcp.pop %v797
    %v812 = vrcp.pop %v800
    %v813 = vrcp.pop %v803
    %v814 = vrcp.pop %v806
    %v815 = vrcp.pop %v809
    %v816 = vmul.f32 %v781, %v810
    %v817 = vmul.f32 %v783, %v811
    %v818 = vmul.f32 %v785, %v812
    %v819 = vmul.f32 %v787, %v813
    %v820 = vmul.f32 %v789, %v814
    %v821 = vmul.f32 %v791, %v815
    %826 = vrot.lane.b32.xlu0 %v564, 80
    %v827 = vpop.permute.xlu0 %826
    %828 = vrot.lane.b32.xlu0 %v569, 80
    %v829 = vpop.permute.xlu0 %828
    %830 = vrot.lane.b32.xlu0 %v574, 80
    %v831 = vpop.permute.xlu0 %830
    %832 = vrot.lane.b32.xlu0 %v579, 80
    %v833 = vpop.permute.xlu0 %832
    %v834 = vsel %vm755, %v827, 0
    %v836 = vsel %vm755, %v829, 0
    %v838 = vsel %vm755, %v831, 0
    %v840 = vsel %vm755, %v833, 0
    %v843 = vsel %vm755, %v816, 0
    %v846 = vsel %vm755, %v817, 0
    %v849 = vsel %vm755, %v818, 0
    %v852 = vsel %vm755, %v819, 0
    %v855 = vsel %vm755, %v820, 0
    %v858 = vsel %vm755, %v821, 0
    %860 = vmatprep.subr.mxu0 0.0
    %861 = vmatpush1.xpose.msra.mxu0 %v843
    %862 = vmatprep.subr.mxu0 0.0
    %863 = vmatpush1.xpose.msra.mxu0 %v846
    %864 = vmatprep.subr.mxu0 0.0
    %865 = vmatpush1.xpose.msra.mxu0 %v849
    %866 = vmatprep.subr.mxu0 0.0
    %867 = vmatpush1.xpose.msra.mxu0 %v852
    %868 = vmatprep.subr.mxu0 0.0
    %869 = vmatpush1.xpose.msra.mxu0 %v855
    %870 = vmatprep.subr.mxu0 0.0
    %871 = vmatpush1.xpose.msra.mxu0 %v858
    %872 = vmatprep.subr.mxu0 0.0
    %873 = vmatpush1.xpose.msra.mxu0 0.0
    %874 = vmatprep.subr.mxu0 0.0
    %875 = vmatpush1.xpose.msra.mxu0 0.0
    %876 = vmatprep.subr.mxu0 0.0
    %877 = vmatpush1.xpose.msra.mxu0 0.0
    %878 = vmatprep.subr.mxu0 0.0
    %879 = vmatpush1.xpose.msra.mxu0 0.0
    %880 = vmatprep.subr.mxu0 0.0
    %881 = vmatpush1.xpose.msra.mxu0 0.0
    %882 = vmatprep.subr.mxu0 0.0
    %883 = vmatpush1.xpose.msra.mxu0 0.0
    %884 = vmatprep.subr.mxu0 0.0
    %885 = vmatpush1.xpose.msra.mxu0 0.0
    %886 = vmatprep.subr.mxu0 0.0
    %887 = vmatpush1.xpose.msra.mxu0 0.0
    %888 = vmatprep.subr.mxu0 0.0
    %889 = vmatpush1.xpose.msra.mxu0 0.0
    %890 = vmatprep.subr.mxu0 0.0
    %891 = vmatpush1.xpose.msra.mxu0 0.0
    %892 = vmatprep.subr.mxu0 0.0
    %893 = vmatpush1.xpose.msra.mxu0 0.0
    %894 = vmatprep.subr.mxu0 0.0
    %895 = vmatpush1.xpose.msra.mxu0 0.0
    %896 = vmatprep.subr.mxu0 0.0
    %897 = vmatpush1.xpose.msra.mxu0 0.0
    %898 = vmatprep.subr.mxu0 0.0
    %899 = vmatpush1.xpose.msra.mxu0 0.0
    %900 = vmatprep.subr.mxu0 0.0
    %901 = vmatpush1.xpose.msra.mxu0 0.0
    %902 = vmatprep.subr.mxu0 0.0
    %903 = vmatpush1.xpose.msra.mxu0 0.0
    %904 = vmatprep.subr.mxu0 0.0
    %905 = vmatpush1.xpose.msra.mxu0 0.0
    %906 = vmatprep.subr.mxu0 0.0
    %907 = vmatpush1.xpose.msra.mxu0 0.0
    %908 = vmatprep.subr.mxu0 0.0
    %909 = vmatpush1.xpose.msra.mxu0 0.0
    %910 = vmatprep.subr.mxu0 0.0
    %911 = vmatpush1.xpose.msra.mxu0 0.0
    %912 = vmatprep.subr.mxu0 0.0
    %913 = vmatpush1.xpose.msra.mxu0 0.0
    %914 = vmatprep.subr.mxu0 0.0
    %915 = vmatpush1.xpose.msra.mxu0 0.0
    %916 = vmatprep.subr.mxu0 0.0
    %917 = vmatpush1.xpose.msra.mxu0 0.0
    %918 = vmatprep.subr.mxu0 0.0
    %919 = vmatpush1.xpose.msra.mxu0 0.0
    %920 = vmatprep.subr.mxu0 0.0
    %921 = vmatpush1.xpose.msra.mxu0 0.0
    %922 = vmatprep.subr.mxu0 0.0
    %923 = vmatpush1.xpose.msra.mxu0 0.0
    %924 = vmatprep.mubr.f32.mxu0 0.0
    %925 = vmatmul.mubr.f32.gmra.mrb[0].mxu0 %v834
    %v926 = vpop.f32.mrb[0].mxu0
    %v927 = vadd.f32 0.0, %v926
    %v928 = vpop.f32.mrb[0].mxu0
    %929 = vmatprep.mubr.f32.mxu0 0.0
    %930 = vmatmul.mubr.f32.gmra.mrb[0].mxu0 %v836
    %v931 = vpop.f32.mrb[0].mxu0
    %v932 = vadd.f32 0.0, %v931
    %v933 = vpop.f32.mrb[0].mxu0
    %934 = vmatprep.mubr.f32.mxu0 0.0
    %935 = vmatmul.mubr.f32.gmra.mrb[0].mxu0 %v838
    %v936 = vpop.f32.mrb[0].mxu0
    %v937 = vadd.f32 0.0, %v936
    %v938 = vpop.f32.mrb[0].mxu0
    %939 = vmatprep.mubr.f32.mxu0 0.0
    %940 = vmatmul.mubr.f32.gmra.mrb[0].mxu0 %v840
    %v941 = vpop.f32.mrb[0].mxu0
    %v942 = vadd.f32 0.0, %v941
    %v943 = vpop.f32.mrb[0].mxu0
    %944 = vdwg.mxu0
    %v945 = vadd.f32 %v381, %v927
    %v946 = vadd.f32 %v382, %v932
    %v947 = vadd.f32 %v383, %v937
    %v948 = vadd.f32 %v384, %v942
    %v949 = vmul.f32 %v945, %v945
    %v950 = vmul.f32 %v946, %v946
    %v951 = vmul.f32 %v947, %v947
    %v952 = vmul.f32 %v948, %v948
    %v953 = vlaneseq
    %v954 = vshrl.u32 %v953, 7
    %v955 = vsub.s32 0, %v954
    %v956 = vrot.slane %v413, %v955
    %v957 = vmul.f32 %v945, %v956
    %v958 = vmul.f32 %v946, %v956
    %v959 = vmul.f32 %v947, %v956
    %v960 = vmul.f32 %v948, %v956
    %vm961 = vcmask 392192
    %v962 = vsel %vm961, %v957, 0.0
    %v963 = vsel %vm961, %v958, 0.0
    %v964 = vadd.f32 %v962, %v963
    %v965 = vsel %vm961, %v959, 0.0
    %v966 = vadd.f32 %v964, %v965
    %v967 = vsel %vm961, %v960, 0.0
    %v968 = vadd.f32 %v966, %v967
    %969 = vadd.xlane.f32.xlu0 %v968
    %v970 = vpop.xlane.xlu0 %969
    %v971 = vrot.slane %v970, 4
    %v972 = vadd.f32 %v970, %v971
    %v973 = vrot.slane %v972, 2
    %v974 = vadd.f32 %v972, %v973
    %v975 = vrot.slane %v974, 1
    %v976 = vadd.f32 %v974, %v975
    %s977 = vtos %v976
    %v978 = vmul.f32 %v949, %v956
    %v979 = vmul.f32 %v950, %v956
    %v980 = vmul.f32 %v951, %v956
    %v981 = vmul.f32 %v952, %v956
    %v982 = vsel %vm961, %v978, 0.0
    %v983 = vsel %vm961, %v979, 0.0
    %v984 = vadd.f32 %v982, %v983
    %v985 = vsel %vm961, %v980, 0.0
    %v986 = vadd.f32 %v984, %v985
    %v987 = vsel %vm961, %v981, 0.0
    %v988 = vadd.f32 %v986, %v987
    %989 = vadd.xlane.f32.xlu0 %v988
    %v990 = vpop.xlane.xlu0 %989
    %v991 = vrot.slane %v990, 4
    %v992 = vadd.f32 %v990, %v991
    %v993 = vrot.slane %v992, 2
    %v994 = vadd.f32 %v992, %v993
    %v995 = vrot.slane %v994, 1
    %v996 = vadd.f32 %v994, %v995
    %s997 = vtos %v996
    %s998 = smul.f32 %s977, 0.0013020834
    %s999 = smul.f32 %s997, 0.0013020834
    %s1000 = smul.f32 %s998, %s998
    %s1001 = ssub.f32 %s999, %s1000
    %s1002 = sadd.f32 %s1001, 1e-05
    %v1003 = vstv %s1002
    %v1004 = vrsqrt.pop %v1003
    %s1005 = vtos %v1004
    %v1006 = vstv %s998
    %v1007 = vmul.f32 %v1006, %v413
    %v1008 = vadd.f32 %v1007, 0.0
    %v1009 = vstv %s1005
    %v1010 = vmul.f32 %v1009, %v413
    %v1011 = vadd.f32 %v1010, 0.0
    %v1012 = vlaneseq
    %v1013 = vshrl.u32 %v1012, 7
    %v1014 = vsub.s32 1, %v1013
    %v1015 = vrot.slane %v413, %v1014
    %v1016 = vmul.f32 %v945, %v1015
    %v1017 = vmul.f32 %v946, %v1015
    %v1018 = vmul.f32 %v947, %v1015
    %v1019 = vmul.f32 %v948, %v1015
    %v1020 = vsel %vm961, %v1016, 0.0
    %v1021 = vsel %vm961, %v1017, 0.0
    %v1022 = vadd.f32 %v1020, %v1021
    %v1023 = vsel %vm961, %v1018, 0.0
    %v1024 = vadd.f32 %v1022, %v1023
    %v1025 = vsel %vm961, %v1019, 0.0
    %v1026 = vadd.f32 %v1024, %v1025
    %1027 = vadd.xlane.f32.xlu0 %v1026
    %v1028 = vpop.xlane.xlu0 %1027
    %v1029 = vrot.slane %v1028, 4
    %v1030 = vadd.f32 %v1028, %v1029
    %v1031 = vrot.slane %v1030, 2
    %v1032 = vadd.f32 %v1030, %v1031
    %v1033 = vrot.slane %v1032, 1
    %v1034 = vadd.f32 %v1032, %v1033
    %s1035 = vtos %v1034
    %v1036 = vmul.f32 %v949, %v1015
    %v1037 = vmul.f32 %v950, %v1015
    %v1038 = vmul.f32 %v951, %v1015
    %v1039 = vmul.f32 %v952, %v1015
    %v1040 = vsel %vm961, %v1036, 0.0
    %v1041 = vsel %vm961, %v1037, 0.0
    %v1042 = vadd.f32 %v1040, %v1041
    %v1043 = vsel %vm961, %v1038, 0.0
    %v1044 = vadd.f32 %v1042, %v1043
    %v1045 = vsel %vm961, %v1039, 0.0
    %v1046 = vadd.f32 %v1044, %v1045
    %1047 = vadd.xlane.f32.xlu0 %v1046
    %v1048 = vpop.xlane.xlu0 %1047
    %v1049 = vrot.slane %v1048, 4
    %v1050 = vadd.f32 %v1048, %v1049
    %v1051 = vrot.slane %v1050, 2
    %v1052 = vadd.f32 %v1050, %v1051
    %v1053 = vrot.slane %v1052, 1
    %v1054 = vadd.f32 %v1052, %v1053
    %s1055 = vtos %v1054
    %s1056 = smul.f32 %s1035, 0.0013020834
    %s1057 = smul.f32 %s1055, 0.0013020834
    %s1058 = smul.f32 %s1056, %s1056
    %s1059 = ssub.f32 %s1057, %s1058
    %s1060 = sadd.f32 %s1059, 1e-05
    %v1061 = vstv %s1060
    %v1062 = vrsqrt.pop %v1061
    %s1063 = vtos %v1062
    %v1064 = vstv %s1056
    %v1065 = vmul.f32 %v1064, %v413
    %v1067 = vrot.slane %v1065, 1
    %v1069 = vadd.f32 %v1008, %v1067
    %v1070 = vstv %s1063
    %v1071 = vmul.f32 %v1070, %v413
    %v1073 = vrot.slane %v1071, 1
    %v1075 = vadd.f32 %v1011, %v1073
    %v1076 = vlaneseq
    %v1077 = vshrl.u32 %v1076, 7
    %v1078 = vsub.s32 0, %v1077
    %v1079 = vrot.slane %v1069, %v1078
    %v1080 = vsub.f32 %v945, %v1079
    %v1081 = vsub.f32 %v946, %v1079
    %v1082 = vsub.f32 %v947, %v1079
    %v1083 = vsub.f32 %v948, %v1079
    %v1084 = vlaneseq
    %v1085 = vshrl.u32 %v1084, 7
    %v1086 = vsub.s32 0, %v1085
    %v1087 = vrot.slane %v1075, %v1086
    %v1088 = vmul.f32 %v1080, %v1087
    %v1089 = vmul.f32 %v1081, %v1087
    %v1090 = vmul.f32 %v1082, %v1087
    %v1091 = vmul.f32 %v1083, %v1087
    %v1092 = vmul.f32 %v1088, %v405
    %v1093 = vmul.f32 %v1089, %v406
    %v1094 = vmul.f32 %v1090, %v407
    %v1095 = vmul.f32 %v1091, %v408
    %v1096 = vadd.f32 %v1092, %v409
    %v1097 = vadd.f32 %v1093, %v410
    %v1098 = vadd.f32 %v1094, %v411
    %v1099 = vadd.f32 %v1095, %v412
    %v1101 = vsel %vm420, %v397, 0
    %v1104 = vsel %vm420, %v398, 0
    %v1107 = vsel %vm420, %v399, 0
    %v1110 = vsel %vm420, %v400, 0
    %1112 = vmatprep.subr.mxu0 0.0
    %1113 = vmatpush1.msra.mxu0 %v1096
    %1114 = vmatprep.subr.mxu0 0.0
    %1115 = vmatpush1.msra.mxu0 %v1097
    %1116 = vmatprep.subr.mxu0 0.0
    %1117 = vmatpush1.msra.mxu0 %v1098
    %1118 = vmatprep.subr.mxu0 0.0
    %1119 = vmatpush1.msra.mxu0 %v1099
    %1120 = vmatprep.subr.mxu0 0.0
    %1121 = vmatpush1.msra.mxu0 0.0
    %1122 = vmatprep.subr.mxu0 0.0
    %1123 = vmatpush1.msra.mxu0 0.0
    %1124 = vmatprep.subr.mxu0 0.0
    %1125 = vmatpush1.msra.mxu0 0.0
    %1126 = vmatprep.subr.mxu0 0.0
    %1127 = vmatpush1.msra.mxu0 0.0
    %1128 = vmatprep.subr.mxu0 0.0
    %1129 = vmatpush1.msra.mxu0 0.0
    %1130 = vmatprep.subr.mxu0 0.0
    %1131 = vmatpush1.msra.mxu0 0.0
    %1132 = vmatprep.subr.mxu0 0.0
    %1133 = vmatpush1.msra.mxu0 0.0
    %1134 = vmatprep.subr.mxu0 0.0
    %1135 = vmatpush1.msra.mxu0 0.0
    %1136 = vmatprep.subr.mxu0 0.0
    %1137 = vmatpush1.msra.mxu0 0.0
    %1138 = vmatprep.subr.mxu0 0.0
    %1139 = vmatpush1.msra.mxu0 0.0
    %1140 = vmatprep.subr.mxu0 0.0
    %1141 = vmatpush1.msra.mxu0 0.0
    %1142 = vmatprep.subr.mxu0 0.0
    %1143 = vmatpush1.msra.mxu0 0.0
    %1144 = vmatprep.subr.mxu0 0.0
    %1145 = vmatpush1.msra.mxu0 0.0
    %1146 = vmatprep.subr.mxu0 0.0
    %1147 = vmatpush1.msra.mxu0 0.0
    %1148 = vmatprep.subr.mxu0 0.0
    %1149 = vmatpush1.msra.mxu0 0.0
    %1150 = vmatprep.subr.mxu0 0.0
    %1151 = vmatpush1.msra.mxu0 0.0
    %1152 = vmatprep.subr.mxu0 0.0
    %1153 = vmatpush1.msra.mxu0 0.0
    %1154 = vmatprep.subr.mxu0 0.0
    %1155 = vmatpush1.msra.mxu0 0.0
    %1156 = vmatprep.subr.mxu0 0.0
    %1157 = vmatpush1.msra.mxu0 0.0
    %1158 = vmatprep.subr.mxu0 0.0
    %1159 = vmatpush1.msra.mxu0 0.0
    %1160 = vmatprep.subr.mxu0 0.0
    %1161 = vmatpush1.msra.mxu0 0.0
    %1162 = vmatprep.subr.mxu0 0.0
    %1163 = vmatpush1.msra.mxu0 0.0
    %1164 = vmatprep.subr.mxu0 0.0
    %1165 = vmatpush1.msra.mxu0 0.0
    %1166 = vmatprep.subr.mxu0 0.0
    %1167 = vmatpush1.msra.mxu0 0.0
    %1168 = vmatprep.subr.mxu0 0.0
    %1169 = vmatpush1.msra.mxu0 0.0
    %1170 = vmatprep.subr.mxu0 0.0
    %1171 = vmatpush1.msra.mxu0 0.0
    %1172 = vmatprep.subr.mxu0 0.0
    %1173 = vmatpush1.msra.mxu0 0.0
    %1174 = vmatprep.subr.mxu0 0.0
    %1175 = vmatpush1.msra.mxu0 0.0
    %1176 = vmatprep.mubr.f32.mxu0 0.0
    %1177 = vmatmul.mubr.f32.gmra.mrb[0].mxu0 %v1101
    %v1178 = vpop.f32.mrb[0].mxu0
    %v1179 = vadd.f32 0.0, %v1178
    %v1180 = vpop.f32.mrb[0].mxu0
    %1181 = vmatprep.mubr.f32.mxu0 0.0
    %1182 = vmatmul.mubr.f32.gmra.mrb[0].mxu0 %v1104
    %v1183 = vpop.f32.mrb[0].mxu0
    %v1184 = vadd.f32 0.0, %v1183
    %v1185 = vpop.f32.mrb[0].mxu0
    %1186 = vmatprep.mubr.f32.mxu0 0.0
    %1187 = vmatmul.mubr.f32.gmra.mrb[0].mxu0 %v1107
    %v1188 = vpop.f32.mrb[0].mxu0
    %v1189 = vadd.f32 0.0, %v1188
    %v1190 = vpop.f32.mrb[0].mxu0
    %1191 = vmatprep.mubr.f32.mxu0 0.0
    %1192 = vmatmul.mubr.f32.gmra.mrb[0].mxu0 %v1110
    %v1193 = vpop.f32.mrb[0].mxu0
    %v1194 = vadd.f32 0.0, %v1193
    %v1195 = vpop.f32.mrb[0].mxu0
    %1196 = vdwg.mxu0
    %v1197 = vmax.f32 %v1179, 0.0
    %v1198 = vmax.f32 %v1184, 0.0
    %v1199 = vmax.f32 %v1189, 0.0
    %v1200 = vmax.f32 %v1194, 0.0
    %v1202 = vsel %vm420, %v401, 0
    %v1205 = vsel %vm420, %v402, 0
    %v1208 = vsel %vm420, %v403, 0
    %v1211 = vsel %vm420, %v404, 0
    %1213 = vmatprep.subr.mxu0 0.0
    %1214 = vmatpush1.msra.mxu0 %v1197
    %1215 = vmatprep.subr.mxu0 0.0
    %1216 = vmatpush1.msra.mxu0 %v1198
    %1217 = vmatprep.subr.mxu0 0.0
    %1218 = vmatpush1.msra.mxu0 %v1199
    %1219 = vmatprep.subr.mxu0 0.0
    %1220 = vmatpush1.msra.mxu0 %v1200
    %1221 = vmatprep.subr.mxu0 0.0
    %1222 = vmatpush1.msra.mxu0 0.0
    %1223 = vmatprep.subr.mxu0 0.0
    %1224 = vmatpush1.msra.mxu0 0.0
    %1225 = vmatprep.subr.mxu0 0.0
    %1226 = vmatpush1.msra.mxu0 0.0
    %1227 = vmatprep.subr.mxu0 0.0
    %1228 = vmatpush1.msra.mxu0 0.0
    %1229 = vmatprep.subr.mxu0 0.0
    %1230 = vmatpush1.msra.mxu0 0.0
    %1231 = vmatprep.subr.mxu0 0.0
    %1232 = vmatpush1.msra.mxu0 0.0
    %1233 = vmatprep.subr.mxu0 0.0
    %1234 = vmatpush1.msra.mxu0 0.0
    %1235 = vmatprep.subr.mxu0 0.0
    %1236 = vmatpush1.msra.mxu0 0.0
    %1237 = vmatprep.subr.mxu0 0.0
    %1238 = vmatpush1.msra.mxu0 0.0
    %1239 = vmatprep.subr.mxu0 0.0
    %1240 = vmatpush1.msra.mxu0 0.0
    %1241 = vmatprep.subr.mxu0 0.0
    %1242 = vmatpush1.msra.mxu0 0.0
    %1243 = vmatprep.subr.mxu0 0.0
    %1244 = vmatpush1.msra.mxu0 0.0
    %1245 = vmatprep.subr.mxu0 0.0
    %1246 = vmatpush1.msra.mxu0 0.0
    %1247 = vmatprep.subr.mxu0 0.0
    %1248 = vmatpush1.msra.mxu0 0.0
    %1249 = vmatprep.subr.mxu0 0.0
    %1250 = vmatpush1.msra.mxu0 0.0
    %1251 = vmatprep.subr.mxu0 0.0
    %1252 = vmatpush1.msra.mxu0 0.0
    %1253 = vmatprep.subr.mxu0 0.0
    %1254 = vmatpush1.msra.mxu0 0.0
    %1255 = vmatprep.subr.mxu0 0.0
    %1256 = vmatpush1.msra.mxu0 0.0
    %1257 = vmatprep.subr.mxu0 0.0
    %1258 = vmatpush1.msra.mxu0 0.0
    %1259 = vmatprep.subr.mxu0 0.0
    %1260 = vmatpush1.msra.mxu0 0.0
    %1261 = vmatprep.subr.mxu0 0.0
    %1262 = vmatpush1.msra.mxu0 0.0
    %1263 = vmatprep.subr.mxu0 0.0
    %1264 = vmatpush1.msra.mxu0 0.0
    %1265 = vmatprep.subr.mxu0 0.0
    %1266 = vmatpush1.msra.mxu0 0.0
    %1267 = vmatprep.subr.mxu0 0.0
    %1268 = vmatpush1.msra.mxu0 0.0
    %1269 = vmatprep.subr.mxu0 0.0
    %1270 = vmatpush1.msra.mxu0 0.0
    %1271 = vmatprep.subr.mxu0 0.0
    %1272 = vmatpush1.msra.mxu0 0.0
    %1273 = vmatprep.subr.mxu0 0.0
    %1274 = vmatpush1.msra.mxu0 0.0
    %1275 = vmatprep.subr.mxu0 0.0
    %1276 = vmatpush1.msra.mxu0 0.0
    %1277 = vmatprep.mubr.f32.mxu0 0.0
    %1278 = vmatmul.mubr.f32.gmra.mrb[0].mxu0 %v1202
    %v1279 = vpop.f32.mrb[0].mxu0
    %v1280 = vadd.f32 0.0, %v1279
    %v1281 = vpop.f32.mrb[0].mxu0
    %1282 = vmatprep.mubr.f32.mxu0 0.0
    %1283 = vmatmul.mubr.f32.gmra.mrb[0].mxu0 %v1205
    %v1284 = vpop.f32.mrb[0].mxu0
    %v1285 = vadd.f32 0.0, %v1284
    %v1286 = vpop.f32.mrb[0].mxu0
    %1287 = vmatprep.mubr.f32.mxu0 0.0
    %1288 = vmatmul.mubr.f32.gmra.mrb[0].mxu0 %v1208
    %v1289 = vpop.f32.mrb[0].mxu0
    %v1290 = vadd.f32 0.0, %v1289
    %v1291 = vpop.f32.mrb[0].mxu0
    %1292 = vmatprep.mubr.f32.mxu0 0.0
    %1293 = vmatmul.mubr.f32.gmra.mrb[0].mxu0 %v1211
    %v1294 = vpop.f32.mrb[0].mxu0
    %v1295 = vadd.f32 0.0, %v1294
    %v1296 = vpop.f32.mrb[0].mxu0
    %1297 = vdwg.mxu0
    %v1298 = vadd.f32 %v1096, %v1280
    %v1299 = vadd.f32 %v1097, %v1285
    %v1300 = vadd.f32 %v1098, %v1290
    %v1301 = vadd.f32 %v1099, %v1295
    %v1302 = vmul.f32 %v1298, %v1298
    %v1303 = vmul.f32 %v1299, %v1299
    %v1304 = vmul.f32 %v1300, %v1300
    %v1305 = vmul.f32 %v1301, %v1301
    %v1306 = vmul.f32 %v1298, %v956
    %v1307 = vmul.f32 %v1299, %v956
    %v1308 = vmul.f32 %v1300, %v956
    %v1309 = vmul.f32 %v1301, %v956
    %v1310 = vsel %vm961, %v1306, 0.0
    %v1311 = vsel %vm961, %v1307, 0.0
    %v1312 = vadd.f32 %v1310, %v1311
    %v1313 = vsel %vm961, %v1308, 0.0
    %v1314 = vadd.f32 %v1312, %v1313
    %v1315 = vsel %vm961, %v1309, 0.0
    %v1316 = vadd.f32 %v1314, %v1315
    %1317 = vadd.xlane.f32.xlu0 %v1316
    %v1318 = vpop.xlane.xlu0 %1317
    %v1319 = vrot.slane %v1318, 4
    %v1320 = vadd.f32 %v1318, %v1319
    %v1321 = vrot.slane %v1320, 2
    %v1322 = vadd.f32 %v1320, %v1321
    %v1323 = vrot.slane %v1322, 1
    %v1324 = vadd.f32 %v1322, %v1323
    %s1325 = vtos %v1324
    %v1326 = vmul.f32 %v1302, %v956
    %v1327 = vmul.f32 %v1303, %v956
    %v1328 = vmul.f32 %v1304, %v956
    %v1329 = vmul.f32 %v1305, %v956
    %v1330 = vsel %vm961, %v1326, 0.0
    %v1331 = vsel %vm961, %v1327, 0.0
    %v1332 = vadd.f32 %v1330, %v1331
    %v1333 = vsel %vm961, %v1328, 0.0
    %v1334 = vadd.f32 %v1332, %v1333
    %v1335 = vsel %vm961, %v1329, 0.0
    %v1336 = vadd.f32 %v1334, %v1335
    %1337 = vadd.xlane.f32.xlu0 %v1336
    %v1338 = vpop.xlane.xlu0 %1337
    %v1339 = vrot.slane %v1338, 4
    %v1340 = vadd.f32 %v1338, %v1339
    %v1341 = vrot.slane %v1340, 2
    %v1342 = vadd.f32 %v1340, %v1341
    %v1343 = vrot.slane %v1342, 1
    %v1344 = vadd.f32 %v1342, %v1343
    %s1345 = vtos %v1344
    %s1346 = smul.f32 %s1325, 0.0013020834
    %s1347 = smul.f32 %s1345, 0.0013020834
    %s1348 = smul.f32 %s1346, %s1346
    %s1349 = ssub.f32 %s1347, %s1348
    %s1350 = sadd.f32 %s1349, 1e-05
    %v1351 = vstv %s1350
    %v1352 = vrsqrt.pop %v1351
    %s1353 = vtos %v1352
    %v1354 = vstv %s1346
    %v1355 = vmul.f32 %v1354, %v413
    %v1356 = vadd.f32 %v1355, 0.0
    %v1357 = vstv %s1353
    %v1358 = vmul.f32 %v1357, %v413
    %v1359 = vadd.f32 %v1358, 0.0
    %v1360 = vmul.f32 %v1298, %v1015
    %v1361 = vmul.f32 %v1299, %v1015
    %v1362 = vmul.f32 %v1300, %v1015
    %v1363 = vmul.f32 %v1301, %v1015
    %v1364 = vsel %vm961, %v1360, 0.0
    %v1365 = vsel %vm961, %v1361, 0.0
    %v1366 = vadd.f32 %v1364, %v1365
    %v1367 = vsel %vm961, %v1362, 0.0
    %v1368 = vadd.f32 %v1366, %v1367
    %v1369 = vsel %vm961, %v1363, 0.0
    %v1370 = vadd.f32 %v1368, %v1369
    %1371 = vadd.xlane.f32.xlu0 %v1370
    %v1372 = vpop.xlane.xlu0 %1371
    %v1373 = vrot.slane %v1372, 4
    %v1374 = vadd.f32 %v1372, %v1373
    %v1375 = vrot.slane %v1374, 2
    %v1376 = vadd.f32 %v1374, %v1375
    %v1377 = vrot.slane %v1376, 1
    %v1378 = vadd.f32 %v1376, %v1377
    %s1379 = vtos %v1378
    %v1380 = vmul.f32 %v1302, %v1015
    %v1381 = vmul.f32 %v1303, %v1015
    %v1382 = vmul.f32 %v1304, %v1015
    %v1383 = vmul.f32 %v1305, %v1015
    %v1384 = vsel %vm961, %v1380, 0.0
    %v1385 = vsel %vm961, %v1381, 0.0
    %v1386 = vadd.f32 %v1384, %v1385
    %v1387 = vsel %vm961, %v1382, 0.0
    %v1388 = vadd.f32 %v1386, %v1387
    %v1389 = vsel %vm961, %v1383, 0.0
    %v1390 = vadd.f32 %v1388, %v1389
    %1391 = vadd.xlane.f32.xlu0 %v1390
    %v1392 = vpop.xlane.xlu0 %1391
    %v1393 = vrot.slane %v1392, 4
    %v1394 = vadd.f32 %v1392, %v1393
    %v1395 = vrot.slane %v1394, 2
    %v1396 = vadd.f32 %v1394, %v1395
    %v1397 = vrot.slane %v1396, 1
    %v1398 = vadd.f32 %v1396, %v1397
    %s1399 = vtos %v1398
    %s1400 = smul.f32 %s1379, 0.0013020834
    %s1401 = smul.f32 %s1399, 0.0013020834
    %s1402 = smul.f32 %s1400, %s1400
    %s1403 = ssub.f32 %s1401, %s1402
    %s1404 = sadd.f32 %s1403, 1e-05
    %v1405 = vstv %s1404
    %v1406 = vrsqrt.pop %v1405
    %s1407 = vtos %v1406
    %v1408 = vstv %s1400
    %v1409 = vmul.f32 %v1408, %v413
    %v1411 = vrot.slane %v1409, 1
    %v1413 = vadd.f32 %v1356, %v1411
    %v1414 = vstv %s1407
    %v1415 = vmul.f32 %v1414, %v413
    %v1417 = vrot.slane %v1415, 1
    %v1419 = vadd.f32 %v1359, %v1417
    %v1420 = vlaneseq
    %v1421 = vshrl.u32 %v1420, 7
    %v1422 = vsub.s32 0, %v1421
    %v1423 = vrot.slane %v1413, %v1422
    %v1424 = vsub.f32 %v1298, %v1423
    %v1425 = vsub.f32 %v1299, %v1423
    %v1426 = vsub.f32 %v1300, %v1423
    %v1427 = vsub.f32 %v1301, %v1423
    %v1428 = vlaneseq
    %v1429 = vshrl.u32 %v1428, 7
    %v1430 = vsub.s32 0, %v1429
    %v1431 = vrot.slane %v1419, %v1430
    %v1432 = vmul.f32 %v1424, %v1431
    %v1433 = vmul.f32 %v1425, %v1431
    %v1434 = vmul.f32 %v1426, %v1431
    %v1435 = vmul.f32 %v1427, %v1431
    %v1436 = vmul.f32 %v1432, %v405
    %v1437 = vmul.f32 %v1433, %v406
    %v1438 = vmul.f32 %v1434, %v407
    %v1439 = vmul.f32 %v1435, %v408
    %v1440 = vadd.f32 %v1436, %v409
    %v1441 = vadd.f32 %v1437, %v410
    %v1442 = vadd.f32 %v1438, %v411
    %v1443 = vadd.f32 %v1439, %v412
    %1444 = vst.msk [vmem:[%s8] sm:$0xff] %vm961, %v1440
    %1445 = vst.msk [vmem:[%s8 + $0x8] sm:$0xff] %vm961, %v1441
    %1446 = vst.msk [vmem:[%s8 + $0x10] sm:$0xff] %vm961, %v1442
    %1447 = vst.msk [vmem:[%s8 + $0x18] sm:$0xff] %vm961, %v1443
    // Predicated region
    $region30: #{transformer_decoder.2} parent=1 // pred_check
      _
    $region31: #{transformer_decoder.2} parent=1 // pred_check_branch
      %1449 = sbr.rel (0) target = $region33
    $region32: #{transformer_decoder.2} parent=1 // pred_region
      _
    $region33: #{transformer_decoder.2} parent=1 // pred_fallthru
      _
    // Predicated region
    $region34: #{transformer_decoder.2} parent=1 // pred_check
      _
    $region35: #{transformer_decoder.2} parent=1 // pred_check_branch
      %1451 = sbr.rel (0) target = $region37
    $region36: #{transformer_decoder.2} parent=1 // pred_region
      _
    $region37: #{transformer_decoder.2} parent=1 // pred_fallthru
      _

</llo_original>
